<compile_context>
chip_gen: v7x
topology: tpu7x:2x2x1
jax: 0.10.0
libtpu: 0.0.40
codegen_flags: <defaults>
</compile_context>

<pallas_src>
import numpy as np
import jax
import jax.numpy as jnp
from jax.experimental import pallas as pl
from jax.experimental.pallas import tpu as pltpu


def _round_up(x, m):
    return (x + m - 1) // m * m


def _vmem_limit_bytes():
    # Generation-aware scoped-VMEM limit: ~80% of physical per-core VMEM
    # (v5e/v6e: 128 MiB -> ~102 MiB; v7x: 64 MiB -> ~51 MiB), leaving headroom
    # for compiler-internal scratch and semaphores.
    try:
        cap = int(pltpu.get_tpu_info().vmem_capacity_bytes)
    except Exception:
        cap = 64 * 1024 * 1024  # conservative fallback, safe on every generation
    return max(32 * 1024 * 1024, int(cap * 0.8))


def _choose_batch_tile(batch, per_row_bytes, budget_bytes, min_bt=16):
    """Rows per grid step: multiple of 16 (bf16 sublane packing), aligned to the
    MXU row width (256/128) when the budget allows, capped so the per-step
    activation working set fits `budget_bytes`, and (when the batch is large
    enough) capped so the grid has >=2 steps for v7x's two TensorCores."""
    fit = budget_bytes // max(per_row_bytes, 1)
    fit = max(min_bt, min(1024, int(fit)))
    for align in (256, 128, min_bt):
        if fit >= align:
            fit = (fit // align) * align
            break
    bt = min(fit, _round_up(batch, min_bt))
    if _round_up(batch, min_bt) >= 2 * min_bt:
        bt = min(bt, _round_up((batch + 1) // 2, min_bt))
    return max(min_bt, (bt // min_bt) * min_bt)


def _mm(a, b):
    # (M, K) @ (K, N) with f32 accumulation on the MXU.
    return jnp.dot(a, b, preferred_element_type=jnp.float32)


def _gelu_exact(x):
    # nn.GELU() default (approximate='none'): 0.5 * x * (1 + erf(x / sqrt(2)))
    return 0.5 * x * (1.0 + jax.lax.erf(x * 0.7071067811865476))


# ---------------------------------------------------------------------------
# use_map=True kernel: probe MHA + LayerNorm + MLP + residual + action Linear,
# fully fused (fc2 folded into the action projection), one batch TILE per step.
# ---------------------------------------------------------------------------
def _map_action_kernel(x_ref, kvw_ref, kvb_ref, qmat_ref, sel_ref,
                       ow_ref, ob_ref, lng_ref, lnb_ref,
                       w1_ref, b1_ref, w2a_ref, b2a_ref, aw_ref, o_ref):
    bt, S, D = x_ref.shape
    H = qmat_ref.shape[-1]
    bf16 = jnp.bfloat16

    x = x_ref[...].reshape(bt * S, D)                        # bf16, (bt*S, D)

    # Fused K/V projection: one MXU matmul, M = bt*S rows, N = 2D columns.
    # Keep k/v in bf16 after the bias add (the consuming matmuls accumulate f32).
    kv = (_mm(x, kvw_ref[...]) + kvb_ref[...]).astype(bf16)  # (bt*S, 2D)
    k = kv[:, :D]
    v = kv[:, D:]

    # Per-head attention scores against the (batch-invariant) probe query as ONE
    # matmul: q_mat folds the 1/sqrt(head_dim) scale and the per-head lane mask.
    scores = _mm(k, qmat_ref[...]).reshape(bt, S, H)         # f32

    # Softmax over the sequence axis (f32 stats; reciprocal on the EUP slot).
    m = jnp.max(scores, axis=1, keepdims=True)
    p = jnp.exp(scores - m)
    denom = jnp.sum(p, axis=1, keepdims=True)
    attn = p * pl.reciprocal(denom, approx=True)             # (bt, S, H)

    # Expand head weights back to D lanes with a 0/1 selector matmul, then do the
    # attention-weighted sum over S on the VPU (no per-head Python loop).
    attn_full = _mm(attn.reshape(bt * S, H).astype(bf16), sel_ref[...])     # (bt*S, D) f32
    o = jnp.sum((attn_full * v.astype(jnp.float32)).reshape(bt, S, D), axis=1)  # (bt, D) f32

    attn_out = _mm(o.astype(bf16), ow_ref[...]) + ob_ref[...]               # (bt, D) f32

    # LayerNorm (eps=1e-5, biased variance), f32.
    mu = jnp.mean(attn_out, axis=-1, keepdims=True)
    var = jnp.mean((attn_out - mu) ** 2, axis=-1, keepdims=True)
    y = (attn_out - mu) * jax.lax.rsqrt(var + 1e-5)
    y = y * lng_ref[...] + lnb_ref[...]

    # MLPBlock fc1 + GELU; fc2 is folded into the action projection:
    #   logits = attn_out @ Wa + h1 @ (W2 @ Wa) + (b2 @ Wa + ba)
    h1 = _gelu_exact(_mm(y.astype(bf16), w1_ref[...]) + b1_ref[...])        # (bt, 4D)
    logits = (_mm(attn_out.astype(bf16), aw_ref[...])
              + _mm(h1.astype(bf16), w2a_ref[...])
              + b2a_ref[...])                                               # (bt, Ap) f32
    o_ref[...] = logits.astype(o_ref.dtype)


def linear_action_head_map(llm_output, params, num_heads):
    B, S, D = llm_output.shape
    A = params["act_w"].shape[0]
    H = num_heads
    hd = D // H
    M = params["fc1_w"].shape[0]                             # mlp_dim (4D)
    f32, bf16 = jnp.float32, jnp.bfloat16
    Ap = _round_up(A, 128)                                   # lane-dense output columns

    in_w = params["in_w"].astype(f32)                        # (3D, D) packed q/k/v
    in_b = params["in_b"].reshape(3 * D).astype(f32)
    probe = params["probe"].reshape(1, D).astype(f32)

    # The probe query is batch-invariant -> project it once, outside the kernel.
    q = probe @ in_w[:D].T + in_b[:D]                        # (1, D)

    # Fold the scale and the per-head lane selection into one (D, H) score matrix
    # (scores = K @ q_mat) and an (H, D) 0/1 expander (head weights -> D lanes).
    head_of = jnp.arange(D, dtype=jnp.int32) // hd
    sel_dh = (head_of[:, None] == jnp.arange(H, dtype=jnp.int32)[None, :]).astype(f32)
    q_mat = (q.reshape(D, 1) / float(np.sqrt(hd))) * sel_dh  # (D, H)
    sel_hd = sel_dh.T                                        # (H, D)

    # Pre-transposed (in, out) bf16 weights; f32 biases.  K/V rows of in_proj fused.
    kv_wT = jnp.transpose(in_w[D:]).astype(bf16)             # (D, 2D)
    kv_b = in_b[D:].reshape(1, 2 * D)

    # Action projection (lane-padded to Ap); fc2 algebraically folded into it.
    act_wT = jnp.transpose(params["act_w"]).astype(f32)      # (D, A)
    fc2_wT = jnp.transpose(params["fc2_w"]).astype(f32)      # (M, D)
    w2a = fc2_wT @ act_wT                                    # (M, A)
    b2a = params["fc2_b"].reshape(1, D).astype(f32) @ act_wT \
        + params["act_b"].reshape(1, A).astype(f32)          # (1, A)

    def pad_cols(a):
        return jnp.pad(a, ((0, 0), (0, Ap - A))) if Ap != A else a

    act_wTp = pad_cols(act_wT).astype(bf16)                  # (D, Ap)
    w2a_p = pad_cols(w2a).astype(bf16)                       # (M, Ap)
    b2a_p = pad_cols(b2a).astype(f32)                        # (1, Ap)

    weights = (
        kv_wT, kv_b,
        q_mat.astype(bf16), sel_hd.astype(bf16),
        jnp.transpose(params["out_w"]).astype(bf16), params["out_b"].reshape(1, D).astype(f32),
        params["ln_g"].reshape(1, D).astype(f32), params["ln_b"].reshape(1, D).astype(f32),
        jnp.transpose(params["fc1_w"]).astype(bf16), params["fc1_b"].reshape(1, M).astype(f32),
        w2a_p, b2a_p, act_wTp,
    )

    vmem_limit = _vmem_limit_bytes()
    # Weights are single-buffered (Buffered(1)) -> resident once.
    weight_bytes = sum(int(np.prod(w.shape)) * w.dtype.itemsize for w in weights)
    # Per-row working set: bf16 input (x2 buffers) + f32 kv matmul result + bf16 k/v
    # + f32 attn_full + f32 weighted product, plus small post-pool intermediates.
    per_row = 24 * S * D + 64 * D + 8 * Ap
    budget = max(2 << 20, vmem_limit - weight_bytes - (8 << 20))
    bt = _choose_batch_tile(B, per_row, budget)
    Bp = _round_up(B, bt)
    x = llm_output.astype(bf16)
    if Bp != B:
        x = jnp.pad(x, ((0, Bp - B), (0, 0), (0, 0)))

    def _const_spec(arr):
        # Weights never change block index across the grid: single-buffer them so
        # they occupy VMEM once instead of twice (key on v7x's 64 MiB VMEM).
        zeros = (0,) * arr.ndim
        return pl.BlockSpec(arr.shape, lambda b: zeros, pipeline_mode=pl.Buffered(1))

    grid_spec = pltpu.PrefetchScalarGridSpec(
        num_scalar_prefetch=0,
        grid=(Bp // bt,),
        in_specs=[pl.BlockSpec((bt, S, D), lambda b: (b, 0, 0))]
                 + [_const_spec(w) for w in weights],
        out_specs=pl.BlockSpec((bt, Ap), lambda b: (b, 0)),
    )

    out = pl.pallas_call(
        _map_action_kernel,
        out_shape=jax.ShapeDtypeStruct((Bp, Ap), jnp.float32),
        grid_spec=grid_spec,
        compiler_params=pltpu.CompilerParams(
            dimension_semantics=("parallel",),               # v7x: shard tiles over 2 TCs
            vmem_limit_bytes=vmem_limit),
    )(x, *weights)
    return out[:B, :A]


# ---------------------------------------------------------------------------
# use_map=False kernel: mean over seq + action Linear, batch-tiled.
# ---------------------------------------------------------------------------
def _pool_linear_kernel(x_ref, w_ref, b_ref, o_ref):
    pooled = jnp.mean(x_ref[...].astype(jnp.float32), axis=1)           # (bt, D) f32
    o_ref[...] = (jnp.dot(pooled.astype(jnp.bfloat16), w_ref[...],
                          preferred_element_type=jnp.float32)
                  + b_ref[...]).astype(o_ref.dtype)


def linear_action_head_mean(llm_output, act_w, act_b):
    B, S, D = llm_output.shape
    A = act_w.shape[0]
    f32, bf16 = jnp.float32, jnp.bfloat16
    Ap = _round_up(A, 128)

    vmem_limit = _vmem_limit_bytes()
    # Pure HBM-bandwidth-bound: take the biggest input tile that comfortably fits
    # (bf16 input x2 buffers + f32 cast for the mean  ~= 8*S*D bytes per row).
    bt = _choose_batch_tile(B, per_row_bytes=8 * S * D, budget_bytes=vmem_limit // 2)
    Bp = _round_up(B, bt)
    x = llm_output.astype(bf16)
    if Bp != B:
        x = jnp.pad(x, ((0, Bp - B), (0, 0), (0, 0)))

    act_wT = jnp.transpose(act_w).astype(f32)                # (D, A)
    if Ap != A:
        act_wT = jnp.pad(act_wT, ((0, 0), (0, Ap - A)))
        act_b2 = jnp.pad(act_b.reshape(1, A).astype(f32), ((0, 0), (0, Ap - A)))
    else:
        act_b2 = act_b.reshape(1, A).astype(f32)
    act_wT = act_wT.astype(bf16)

    out = pl.pallas_call(
        _pool_linear_kernel,
        out_shape=jax.ShapeDtypeStruct((Bp, Ap), jnp.float32),
        grid_spec=pltpu.PrefetchScalarGridSpec(
            num_scalar_prefetch=0,
            grid=(Bp // bt,),
            in_specs=[pl.BlockSpec((bt, S, D), lambda i: (i, 0, 0)),
                      pl.BlockSpec((D, Ap), lambda i: (0, 0),
                                   pipeline_mode=pl.Buffered(1)),
                      pl.BlockSpec((1, Ap), lambda i: (0, 0),
                                   pipeline_mode=pl.Buffered(1))],
            out_specs=pl.BlockSpec((bt, Ap), lambda i: (i, 0))),
        compiler_params=pltpu.CompilerParams(
            dimension_semantics=("parallel",),
            vmem_limit_bytes=vmem_limit),
    )(x, act_wT, act_b2)
    return out[:B, :A]


# ---------------------------------------------------------------------------
# Pure-JAX (f32) references for verification
# ---------------------------------------------------------------------------
def ref_map_forward(x, p, num_heads):
    B, S, D = x.shape
    hd = D // num_heads
    probe = jnp.broadcast_to(p["probe"].reshape(1, 1, D), (B, 1, D))
    q = probe @ p["in_w"][0:D].T + p["in_b"][0, 0:D]
    k = x @ p["in_w"][D:2 * D].T + p["in_b"][0, D:2 * D]
    v = x @ p["in_w"][2 * D:].T + p["in_b"][0, 2 * D:]
    qh = q.reshape(B, 1, num_heads, hd).transpose(0, 2, 1, 3)
    kh = k.reshape(B, S, num_heads, hd).transpose(0, 2, 1, 3)
    vh = v.reshape(B, S, num_heads, hd).transpose(0, 2, 1, 3)
    s = jnp.einsum('bhqd,bhkd->bhqk', qh, kh) / jnp.sqrt(float(hd))
    a = jax.nn.softmax(s, axis=-1)
    o = jnp.einsum('bhqk,bhkd->bhqd', a, vh).transpose(0, 2, 1, 3).reshape(B, 1, D)
    attn_out = o @ p["out_w"].T + p["out_b"][0]
    mu = attn_out.mean(-1, keepdims=True)
    var = ((attn_out - mu) ** 2).mean(-1, keepdims=True)
    y = (attn_out - mu) / jnp.sqrt(var + 1e-5) * p["ln_g"][0] + p["ln_b"][0]
    h1 = jax.nn.gelu(y @ p["fc1_w"].T + p["fc1_b"][0], approximate=False)
    mlp = h1 @ p["fc2_w"].T + p["fc2_b"][0]
    pooled = (attn_out + mlp)[:, 0, :]
    return pooled @ p["act_w"].T + p["act_b"][0]


def ref_mean_forward(x, act_w, act_b):
    return x.mean(axis=1) @ act_w.T + act_b[0]


# ---------------------------------------------------------------------------
if __name__ == "__main__":
    B, S, D, A, NH = 2, 8, 32, 7, 4
    MLP_DIM = 4 * D

    key = jax.random.PRNGKey(0)
    ks = jax.random.split(key, 16)

    def rnd(k, shape, scale=0.02):
        return (scale * jax.random.normal(k, shape)).astype(jnp.float32)

    params = {
        "probe": rnd(ks[0], (1, D)),                         # nn.Parameter (1,1,D) squeezed
        "in_w": rnd(ks[1], (3 * D, D)),                      # MHA packed in_proj_weight
        "in_b": rnd(ks[2], (1, 3 * D)),
        "out_w": rnd(ks[3], (D, D)),                         # MHA out_proj
        "out_b": rnd(ks[4], (1, D)),
        "ln_g": (1.0 + rnd(ks[5], (1, D))).astype(jnp.float32),
        "ln_b": rnd(ks[6], (1, D)),
        "fc1_w": rnd(ks[7], (MLP_DIM, D)),                   # MLPBlock Linear(D, 4D)
        "fc1_b": rnd(ks[8], (1, MLP_DIM)),
        "fc2_w": rnd(ks[9], (D, MLP_DIM)),                   # MLPBlock Linear(4D, D)
        "fc2_b": rnd(ks[10], (1, D)),
        "act_w": rnd(ks[11], (A, D)),                        # action_head Linear(D, A)
        "act_b": rnd(ks[12], (1, A)),
    }

    llm_output = jax.random.normal(ks[13], (B, S, D), dtype=jnp.float32)

    # use_map=True path (bf16 matmuls, f32 accumulation -> slightly looser tolerance)
    out_map = jax.block_until_ready(linear_action_head_map(llm_output, params, NH))
    ref_map = ref_map_forward(llm_output, params, NH)
    np.testing.assert_allclose(np.asarray(out_map), np.asarray(ref_map),
                               rtol=5e-3, atol=5e-3)

    # use_map=False path
    out_mean = jax.block_until_ready(
        linear_action_head_mean(llm_output, params["act_w"], params["act_b"]))
    ref_mean = ref_mean_forward(llm_output, params["act_w"], params["act_b"])
    np.testing.assert_allclose(np.asarray(out_mean), np.asarray(ref_mean),
                               rtol=5e-3, atol=5e-3)

    print("KERNEL_OK")
</pallas_src>

<mosaic_0001>
module attributes {stable_mosaic.version = 11 : i64} {
  func.func @_map_action_kernel(%arg0: i32, %arg1: memref<16x8x32xbf16, #tpu.memory_space<vmem>>, %arg2: memref<32x64xbf16, #tpu.memory_space<vmem>>, %arg3: memref<1x64xf32, #tpu.memory_space<vmem>>, %arg4: memref<32x4xbf16, #tpu.memory_space<vmem>>, %arg5: memref<4x32xbf16, #tpu.memory_space<vmem>>, %arg6: memref<32x32xbf16, #tpu.memory_space<vmem>>, %arg7: memref<1x32xf32, #tpu.memory_space<vmem>>, %arg8: memref<1x32xf32, #tpu.memory_space<vmem>>, %arg9: memref<1x32xf32, #tpu.memory_space<vmem>>, %arg10: memref<32x128xbf16, #tpu.memory_space<vmem>>, %arg11: memref<1x128xf32, #tpu.memory_space<vmem>>, %arg12: memref<128x128xbf16, #tpu.memory_space<vmem>>, %arg13: memref<1x128xf32, #tpu.memory_space<vmem>>, %arg14: memref<32x128xbf16, #tpu.memory_space<vmem>>, %arg15: memref<16x128xf32, #tpu.memory_space<vmem>>) attributes {dimension_semantics = [#tpu.dimension_semantics<parallel>], iteration_bounds = array<i64: 1>, scalar_prefetch = 0 : i64, scratch_operands = 0 : i64, tpu.core_type = #tpu.core_type<tc>, window_params = [{transform_indices = @transform_0, window_bounds = array<i64: 16, 8, 32>}, {pipeline_mode = #tpu.pipeline_mode<synchronous>, transform_indices = @transform_1, window_bounds = array<i64: 32, 64>}, {pipeline_mode = #tpu.pipeline_mode<synchronous>, transform_indices = @transform_2, window_bounds = array<i64: 1, 64>}, {pipeline_mode = #tpu.pipeline_mode<synchronous>, transform_indices = @transform_3, window_bounds = array<i64: 32, 4>}, {pipeline_mode = #tpu.pipeline_mode<synchronous>, transform_indices = @transform_4, window_bounds = array<i64: 4, 32>}, {pipeline_mode = #tpu.pipeline_mode<synchronous>, transform_indices = @transform_5, window_bounds = array<i64: 32, 32>}, {pipeline_mode = #tpu.pipeline_mode<synchronous>, transform_indices = @transform_6, window_bounds = array<i64: 1, 32>}, {pipeline_mode = #tpu.pipeline_mode<synchronous>, transform_indices = @transform_7, window_bounds = array<i64: 1, 32>}, {pipeline_mode = #tpu.pipeline_mode<synchronous>, transform_indices = @transform_8, window_bounds = array<i64: 1, 32>}, {pipeline_mode = #tpu.pipeline_mode<synchronous>, transform_indices = @transform_9, window_bounds = array<i64: 32, 128>}, {pipeline_mode = #tpu.pipeline_mode<synchronous>, transform_indices = @transform_10, window_bounds = array<i64: 1, 128>}, {pipeline_mode = #tpu.pipeline_mode<synchronous>, transform_indices = @transform_11, window_bounds = array<i64: 128, 128>}, {pipeline_mode = #tpu.pipeline_mode<synchronous>, transform_indices = @transform_12, window_bounds = array<i64: 1, 128>}, {pipeline_mode = #tpu.pipeline_mode<synchronous>, transform_indices = @transform_13, window_bounds = array<i64: 32, 128>}, {transform_indices = @transform_14, window_bounds = array<i64: 16, 128>}]} {
    %c0 = arith.constant 0 : index
    %c0_0 = arith.constant 0 : index
    %c0_1 = arith.constant 0 : index
    %0 = vector.load %arg1[%c0, %c0_0, %c0_1] : memref<16x8x32xbf16, #tpu.memory_space<vmem>>, vector<16x8x32xbf16>
    %1 = vector.shape_cast %0 : vector<16x8x32xbf16> to vector<128x32xbf16>
    %c0_2 = arith.constant 0 : index
    %c0_3 = arith.constant 0 : index
    %2 = vector.load %arg2[%c0_2, %c0_3] : memref<32x64xbf16, #tpu.memory_space<vmem>>, vector<32x64xbf16>
    %cst = arith.constant dense<0.000000e+00> : vector<128x64xf32>
    %3 = tpu.matmul %1, %2, %cst {dimension_numbers = #tpu.dot_dimension_numbers<[1], [0], [0], [1], [0, 0, 1, 1], [], []>} : vector<128x32xbf16>, vector<32x64xbf16>, vector<128x64xf32> -> vector<128x64xf32>
    %c0_4 = arith.constant 0 : index
    %c0_5 = arith.constant 0 : index
    %4 = vector.load %arg3[%c0_4, %c0_5] : memref<1x64xf32, #tpu.memory_space<vmem>>, vector<1x64xf32>
    %5 = vector.broadcast %4 : vector<1x64xf32> to vector<128x64xf32>
    %6 = arith.addf %3, %5 : vector<128x64xf32>
    %7 = arith.truncf %6 : vector<128x64xf32> to vector<128x64xbf16>
    %8 = vector.extract_strided_slice %7 {offsets = [0, 0], sizes = [128, 32], strides = [1, 1]} : vector<128x64xbf16> to vector<128x32xbf16>
    %9 = vector.extract_strided_slice %7 {offsets = [0, 32], sizes = [128, 32], strides = [1, 1]} : vector<128x64xbf16> to vector<128x32xbf16>
    %c0_6 = arith.constant 0 : index
    %c0_7 = arith.constant 0 : index
    %10 = vector.load %arg4[%c0_6, %c0_7] : memref<32x4xbf16, #tpu.memory_space<vmem>>, vector<32x4xbf16>
    %cst_8 = arith.constant dense<0.000000e+00> : vector<128x4xf32>
    %11 = tpu.matmul %8, %10, %cst_8 {dimension_numbers = #tpu.dot_dimension_numbers<[1], [0], [0], [1], [0, 0, 1, 1], [], []>} : vector<128x32xbf16>, vector<32x4xbf16>, vector<128x4xf32> -> vector<128x4xf32>
    %12 = vector.shape_cast %11 : vector<128x4xf32> to vector<16x8x4xf32>
    %cst_9 = arith.constant dense<0xFF800000> : vector<16x4xf32>
    %13 = vector.multi_reduction <maximumf>, %12, %cst_9 [1] : vector<16x8x4xf32> to vector<16x4xf32>
    %14 = vector.shape_cast %13 : vector<16x4xf32> to vector<16x1x4xf32>
    %15 = vector.broadcast %14 : vector<16x1x4xf32> to vector<16x8x4xf32>
    %16 = arith.subf %12, %15 : vector<16x8x4xf32>
    %17 = math.exp %16 : vector<16x8x4xf32>
    %cst_10 = arith.constant dense<0.000000e+00> : vector<16x4xf32>
    %18 = vector.multi_reduction <add>, %17, %cst_10 [1] : vector<16x8x4xf32> to vector<16x4xf32>
    %19 = vector.shape_cast %18 : vector<16x4xf32> to vector<16x1x4xf32>
    %20 = tpu.reciprocal %19 {approx = true} : vector<16x1x4xf32> -> vector<16x1x4xf32>
    %21 = vector.broadcast %20 : vector<16x1x4xf32> to vector<16x8x4xf32>
    %22 = arith.mulf %17, %21 : vector<16x8x4xf32>
    %23 = vector.shape_cast %22 : vector<16x8x4xf32> to vector<128x4xf32>
    %24 = arith.truncf %23 : vector<128x4xf32> to vector<128x4xbf16>
    %c0_11 = arith.constant 0 : index
    %c0_12 = arith.constant 0 : index
    %25 = vector.load %arg5[%c0_11, %c0_12] : memref<4x32xbf16, #tpu.memory_space<vmem>>, vector<4x32xbf16>
    %cst_13 = arith.constant dense<0.000000e+00> : vector<128x32xf32>
    %26 = tpu.matmul %24, %25, %cst_13 {dimension_numbers = #tpu.dot_dimension_numbers<[1], [0], [0], [1], [0, 0, 1, 1], [], []>} : vector<128x4xbf16>, vector<4x32xbf16>, vector<128x32xf32> -> vector<128x32xf32>
    %27 = arith.extf %9 : vector<128x32xbf16> to vector<128x32xf32>
    %28 = arith.mulf %26, %27 : vector<128x32xf32>
    %29 = vector.shape_cast %28 : vector<128x32xf32> to vector<16x8x32xf32>
    %cst_14 = arith.constant dense<0.000000e+00> : vector<16x32xf32>
    %30 = vector.multi_reduction <add>, %29, %cst_14 [1] : vector<16x8x32xf32> to vector<16x32xf32>
    %31 = arith.truncf %30 : vector<16x32xf32> to vector<16x32xbf16>
    %c0_15 = arith.constant 0 : index
    %c0_16 = arith.constant 0 : index
    %32 = vector.load %arg6[%c0_15, %c0_16] : memref<32x32xbf16, #tpu.memory_space<vmem>>, vector<32x32xbf16>
    %cst_17 = arith.constant dense<0.000000e+00> : vector<16x32xf32>
    %33 = tpu.matmul %31, %32, %cst_17 {dimension_numbers = #tpu.dot_dimension_numbers<[1], [0], [0], [1], [0, 0, 1, 1], [], []>} : vector<16x32xbf16>, vector<32x32xbf16>, vector<16x32xf32> -> vector<16x32xf32>
    %c0_18 = arith.constant 0 : index
    %c0_19 = arith.constant 0 : index
    %34 = vector.load %arg7[%c0_18, %c0_19] : memref<1x32xf32, #tpu.memory_space<vmem>>, vector<1x32xf32>
    %35 = vector.broadcast %34 : vector<1x32xf32> to vector<16x32xf32>
    %36 = arith.addf %33, %35 : vector<16x32xf32>
    %cst_20 = arith.constant dense<0.000000e+00> : vector<16xf32>
    %37 = vector.multi_reduction <add>, %36, %cst_20 [1] : vector<16x32xf32> to vector<16xf32>
    %38 = vector.shape_cast %37 : vector<16xf32> to vector<16x1xf32>
    %cst_21 = arith.constant 3.200000e+01 : f32
    %39 = vector.broadcast %cst_21 : f32 to vector<16x1xf32>
    %40 = arith.divf %38, %39 : vector<16x1xf32>
    %41 = vector.broadcast %40 : vector<16x1xf32> to vector<16x32xf32>
    %42 = arith.subf %36, %41 : vector<16x32xf32>
    %43 = arith.mulf %42, %42 : vector<16x32xf32>
    %cst_22 = arith.constant dense<0.000000e+00> : vector<16xf32>
    %44 = vector.multi_reduction <add>, %43, %cst_22 [1] : vector<16x32xf32> to vector<16xf32>
    %45 = vector.shape_cast %44 : vector<16xf32> to vector<16x1xf32>
    %cst_23 = arith.constant 3.200000e+01 : f32
    %46 = vector.broadcast %cst_23 : f32 to vector<16x1xf32>
    %47 = arith.divf %45, %46 : vector<16x1xf32>
    %48 = vector.broadcast %40 : vector<16x1xf32> to vector<16x32xf32>
    %49 = arith.subf %36, %48 : vector<16x32xf32>
    %cst_24 = arith.constant 9.99999974E-6 : f32
    %50 = vector.broadcast %cst_24 : f32 to vector<16x1xf32>
    %51 = arith.addf %47, %50 : vector<16x1xf32>
    %52 = math.rsqrt %51 : vector<16x1xf32>
    %53 = vector.broadcast %52 : vector<16x1xf32> to vector<16x32xf32>
    %54 = arith.mulf %49, %53 : vector<16x32xf32>
    %c0_25 = arith.constant 0 : index
    %c0_26 = arith.constant 0 : index
    %55 = vector.load %arg8[%c0_25, %c0_26] : memref<1x32xf32, #tpu.memory_space<vmem>>, vector<1x32xf32>
    %56 = vector.broadcast %55 : vector<1x32xf32> to vector<16x32xf32>
    %57 = arith.mulf %54, %56 : vector<16x32xf32>
    %c0_27 = arith.constant 0 : index
    %c0_28 = arith.constant 0 : index
    %58 = vector.load %arg9[%c0_27, %c0_28] : memref<1x32xf32, #tpu.memory_space<vmem>>, vector<1x32xf32>
    %59 = vector.broadcast %58 : vector<1x32xf32> to vector<16x32xf32>
    %60 = arith.addf %57, %59 : vector<16x32xf32>
    %61 = arith.truncf %60 : vector<16x32xf32> to vector<16x32xbf16>
    %c0_29 = arith.constant 0 : index
    %c0_30 = arith.constant 0 : index
    %62 = vector.load %arg10[%c0_29, %c0_30] : memref<32x128xbf16, #tpu.memory_space<vmem>>, vector<32x128xbf16>
    %cst_31 = arith.constant dense<0.000000e+00> : vector<16x128xf32>
    %63 = tpu.matmul %61, %62, %cst_31 {dimension_numbers = #tpu.dot_dimension_numbers<[1], [0], [0], [1], [0, 0, 1, 1], [], []>} : vector<16x32xbf16>, vector<32x128xbf16>, vector<16x128xf32> -> vector<16x128xf32>
    %c0_32 = arith.constant 0 : index
    %c0_33 = arith.constant 0 : index
    %64 = vector.load %arg11[%c0_32, %c0_33] : memref<1x128xf32, #tpu.memory_space<vmem>>, vector<1x128xf32>
    %65 = vector.broadcast %64 : vector<1x128xf32> to vector<16x128xf32>
    %66 = arith.addf %63, %65 : vector<16x128xf32>
    %cst_34 = arith.constant 5.000000e-01 : f32
    %67 = vector.broadcast %cst_34 : f32 to vector<16x128xf32>
    %68 = arith.mulf %67, %66 : vector<16x128xf32>
    %cst_35 = arith.constant 0.707106769 : f32
    %69 = vector.broadcast %cst_35 : f32 to vector<16x128xf32>
    %70 = arith.mulf %66, %69 : vector<16x128xf32>
    %71 = math.erf %70 : vector<16x128xf32>
    %cst_36 = arith.constant 1.000000e+00 : f32
    %72 = vector.broadcast %cst_36 : f32 to vector<16x128xf32>
    %73 = arith.addf %72, %71 : vector<16x128xf32>
    %74 = arith.mulf %68, %73 : vector<16x128xf32>
    %75 = arith.truncf %36 : vector<16x32xf32> to vector<16x32xbf16>
    %c0_37 = arith.constant 0 : index
    %c0_38 = arith.constant 0 : index
    %76 = vector.load %arg14[%c0_37, %c0_38] : memref<32x128xbf16, #tpu.memory_space<vmem>>, vector<32x128xbf16>
    %cst_39 = arith.constant dense<0.000000e+00> : vector<16x128xf32>
    %77 = tpu.matmul %75, %76, %cst_39 {dimension_numbers = #tpu.dot_dimension_numbers<[1], [0], [0], [1], [0, 0, 1, 1], [], []>} : vector<16x32xbf16>, vector<32x128xbf16>, vector<16x128xf32> -> vector<16x128xf32>
    %78 = arith.truncf %74 : vector<16x128xf32> to vector<16x128xbf16>
    %c0_40 = arith.constant 0 : index
    %c0_41 = arith.constant 0 : index
    %79 = vector.load %arg12[%c0_40, %c0_41] : memref<128x128xbf16, #tpu.memory_space<vmem>>, vector<128x128xbf16>
    %cst_42 = arith.constant dense<0.000000e+00> : vector<16x128xf32>
    %80 = tpu.matmul %78, %79, %cst_42 {dimension_numbers = #tpu.dot_dimension_numbers<[1], [0], [0], [1], [0, 0, 1, 1], [], []>} : vector<16x128xbf16>, vector<128x128xbf16>, vector<16x128xf32> -> vector<16x128xf32>
    %81 = arith.addf %77, %80 : vector<16x128xf32>
    %c0_43 = arith.constant 0 : index
    %c0_44 = arith.constant 0 : index
    %82 = vector.load %arg13[%c0_43, %c0_44] : memref<1x128xf32, #tpu.memory_space<vmem>>, vector<1x128xf32>
    %83 = vector.broadcast %82 : vector<1x128xf32> to vector<16x128xf32>
    %84 = arith.addf %81, %83 : vector<16x128xf32>
    %c0_45 = arith.constant 0 : index
    %c0_46 = arith.constant 0 : index
    %85 = vector.load %arg15[%c0_45, %c0_46] : memref<16x128xf32, #tpu.memory_space<vmem>>, vector<16x128xf32>
    tpu.vector_store %arg15[%c0_45, %c0_46], %84 {strides = array<i32>} : memref<16x128xf32, #tpu.memory_space<vmem>>, vector<16x128xf32>,
    return
  }
  func.func @transform_0(%arg0: i32) -> (i32, i32, i32) {
    %c0_i32 = arith.constant 0 : i32
    %c0_i32_0 = arith.constant 0 : i32
    %c0_i32_1 = arith.constant 0 : i32
    return %arg0, %c0_i32, %c0_i32_0 : i32, i32, i32
  }
  func.func @transform_1(%arg0: i32) -> (i32, i32) {
    %c0_i32 = arith.constant 0 : i32
    %c0_i32_0 = arith.constant 0 : i32
    %c0_i32_1 = arith.constant 0 : i32
    return %c0_i32, %c0_i32_0 : i32, i32
  }
  func.func @transform_2(%arg0: i32) -> (i32, i32) {
    %c0_i32 = arith.constant 0 : i32
    %c0_i32_0 = arith.constant 0 : i32
    %c0_i32_1 = arith.constant 0 : i32
    return %c0_i32, %c0_i32_0 : i32, i32
  }
  func.func @transform_3(%arg0: i32) -> (i32, i32) {
    %c0_i32 = arith.constant 0 : i32
    %c0_i32_0 = arith.constant 0 : i32
    %c0_i32_1 = arith.constant 0 : i32
    return %c0_i32, %c0_i32_0 : i32, i32
  }
  func.func @transform_4(%arg0: i32) -> (i32, i32) {
    %c0_i32 = arith.constant 0 : i32
    %c0_i32_0 = arith.constant 0 : i32
    %c0_i32_1 = arith.constant 0 : i32
    return %c0_i32, %c0_i32_0 : i32, i32
  }
  func.func @transform_5(%arg0: i32) -> (i32, i32) {
    %c0_i32 = arith.constant 0 : i32
    %c0_i32_0 = arith.constant 0 : i32
    %c0_i32_1 = arith.constant 0 : i32
    return %c0_i32, %c0_i32_0 : i32, i32
  }
  func.func @transform_6(%arg0: i32) -> (i32, i32) {
    %c0_i32 = arith.constant 0 : i32
    %c0_i32_0 = arith.constant 0 : i32
    %c0_i32_1 = arith.constant 0 : i32
    return %c0_i32, %c0_i32_0 : i32, i32
  }
  func.func @transform_7(%arg0: i32) -> (i32, i32) {
    %c0_i32 = arith.constant 0 : i32
    %c0_i32_0 = arith.constant 0 : i32
    %c0_i32_1 = arith.constant 0 : i32
    return %c0_i32, %c0_i32_0 : i32, i32
  }
  func.func @transform_8(%arg0: i32) -> (i32, i32) {
    %c0_i32 = arith.constant 0 : i32
    %c0_i32_0 = arith.constant 0 : i32
    %c0_i32_1 = arith.constant 0 : i32
    return %c0_i32, %c0_i32_0 : i32, i32
  }
  func.func @transform_9(%arg0: i32) -> (i32, i32) {
    %c0_i32 = arith.constant 0 : i32
    %c0_i32_0 = arith.constant 0 : i32
    %c0_i32_1 = arith.constant 0 : i32
    return %c0_i32, %c0_i32_0 : i32, i32
  }
  func.func @transform_10(%arg0: i32) -> (i32, i32) {
    %c0_i32 = arith.constant 0 : i32
    %c0_i32_0 = arith.constant 0 : i32
    %c0_i32_1 = arith.constant 0 : i32
    return %c0_i32, %c0_i32_0 : i32, i32
  }
  func.func @transform_11(%arg0: i32) -> (i32, i32) {
    %c0_i32 = arith.constant 0 : i32
    %c0_i32_0 = arith.constant 0 : i32
    %c0_i32_1 = arith.constant 0 : i32
    return %c0_i32, %c0_i32_0 : i32, i32
  }
  func.func @transform_12(%arg0: i32) -> (i32, i32) {
    %c0_i32 = arith.constant 0 : i32
    %c0_i32_0 = arith.constant 0 : i32
    %c0_i32_1 = arith.constant 0 : i32
    return %c0_i32, %c0_i32_0 : i32, i32
  }
  func.func @transform_13(%arg0: i32) -> (i32, i32) {
    %c0_i32 = arith.constant 0 : i32
    %c0_i32_0 = arith.constant 0 : i32
    %c0_i32_1 = arith.constant 0 : i32
    return %c0_i32, %c0_i32_0 : i32, i32
  }
  func.func @transform_14(%arg0: i32) -> (i32, i32) {
    %c0_i32 = arith.constant 0 : i32
    %c0_i32_0 = arith.constant 0 : i32
    return %arg0, %c0_i32 : i32, i32
  }
}

</mosaic_0001>

<llo_original>
// kernel: tpu_custom_call.1
$region0: #{tpu_custom_call.1}
  #allocation0 [shape = 'u32[]', space=smem, size = 0x4, offset = 0x4, fixed_abs, tag = 'smem constant byte address 0x4 - core index']
  #allocation1 [shape = 'u32[144,128]{1,0:T(1,128)}', space=vmem, size = 0x12000, scoped, tag = 'internal scratch']
  %s0 = inlined_call_operand.hbm [shape: bf16[16,8,32], index: 0, kind: input, shape index: {}]
  %s1 = inlined_call_operand.vmem [shape: bf16[32,64], index: 1, kind: input, shape index: {}]
  %s2 = inlined_call_operand.hbm [shape: f32[1,64], index: 2, kind: input, shape index: {}]
  %s3 = inlined_call_operand.vmem [shape: bf16[32,4], index: 3, kind: input, shape index: {}]
  %s4 = inlined_call_operand.hbm [shape: bf16[4,32], index: 4, kind: input, shape index: {}]
  %s5 = inlined_call_operand.vmem [shape: bf16[32,32], index: 5, kind: input, shape index: {}]
  %s6 = inlined_call_operand.hbm [shape: f32[1,32], index: 6, kind: input, shape index: {}]
  %s7 = inlined_call_operand.hbm [shape: f32[1,32], index: 7, kind: input, shape index: {}]
  %s8 = inlined_call_operand.hbm [shape: f32[1,32], index: 8, kind: input, shape index: {}]
  %s9 = inlined_call_operand.vmem [shape: bf16[32,128], index: 9, kind: input, shape index: {}]
  %s10 = inlined_call_operand.vmem [shape: f32[1,128], index: 10, kind: input, shape index: {}]
  %s11 = inlined_call_operand.hbm [shape: bf16[128,128], index: 11, kind: input, shape index: {}]
  %s12 = inlined_call_operand.vmem [shape: f32[1,128], index: 12, kind: input, shape index: {}]
  %s13 = inlined_call_operand.vmem [shape: bf16[32,128], index: 13, kind: input, shape index: {}]
  %s14 = inlined_call_operand.hbm [shape: f32[16,128], index: 14, kind: output, shape index: {}]
  %s15 = sld [smem:[#allocation0]]
  $region94: #{tpu_custom_call.1} parent=0
    _
  %s17 = ssub.s32 1, %s15
  %s18 = scalar_select 0, %s17, %s15
  $region1: #{tpu_custom_call.1} parent=0
    #allocation2 [shape = 'u8[32768]{0}', space=vmem, size = 0x8000, scoped, tag = 'input window, operand 0, single buffered']
    #allocation3 [shape = 's32[1]{0}', space=sflag, size = 0x4, scoped, tag = 'scoped memory for tpu_custom_call.1']
    #allocation4 [shape = 's32[1]{0}', space=sflag, size = 0x4, scoped, tag = 'scoped memory for tpu_custom_call.1']
    #allocation5 [shape = 'u8[512]{0}', space=vmem, size = 0x400, scoped, tag = 'input window, operand 2, single buffered']
    #allocation6 [shape = 's32[1]{0}', space=sflag, size = 0x4, scoped, tag = 'scoped memory for tpu_custom_call.1']
    #allocation7 [shape = 'u8[1024]{0}', space=vmem, size = 0x400, scoped, tag = 'input window, operand 4, single buffered']
    #allocation8 [shape = 'u8[512]{0}', space=vmem, size = 0x400, scoped, tag = 'input window, operand 6, single buffered']
    #allocation9 [shape = 's32[1]{0}', space=sflag, size = 0x4, scoped, tag = 'scoped memory for tpu_custom_call.1']
    #allocation10 [shape = 'u8[512]{0}', space=vmem, size = 0x400, scoped, tag = 'input window, operand 7, single buffered']
    #allocation11 [shape = 'u8[512]{0}', space=vmem, size = 0x400, scoped, tag = 'input window, operand 8, single buffered']
    #allocation12 [shape = 's32[1]{0}', space=sflag, size = 0x4, scoped, tag = 'scoped memory for tpu_custom_call.1']
    #allocation13 [shape = 'u8[32768]{0}', space=vmem, size = 0x8000, scoped, tag = 'input window, operand 11, single buffered']
    #allocation14 [shape = 'u8[8192]{0}', space=vmem, size = 0x2000, scoped, tag = 'output window, operand 0, single buffered']
    %19 = vsyncpa [#allocation3], 0
    %20 = vsyncpa [#allocation6], 0
    %21 = vsyncpa [#allocation9], 0
    %22 = vsyncpa [#allocation12], 0
    %23 = vsyncpa [#allocation4], 0
    // Predicated region
    $region2: #{tpu_custom_call.1} parent=1 // pred_check
      _
    $region3: #{tpu_custom_call.1} parent=1 // pred_check_branch
      %25 = sbr.rel (0) target = $region5
    $region4: #{tpu_custom_call.1} parent=1 // pred_region
      %s27 = ssub.s32 1024, 1024
      %28 = vsyncadd [#allocation3], %s27
      %s29 = sshll.u32 [#allocation2], 4
      %s30 = int_to_ptr.vmem [resolvable:$true] %s29
      %35 = dma.hbm_to_vmem [thread:$0]  %s0, 1024, %s30, [#allocation3], 64, 64, 4
    $region5: #{tpu_custom_call.1} parent=1 // pred_fallthru
      _
    // Predicated region
    $region6: #{tpu_custom_call.1} parent=1 // pred_check
      _
    $region7: #{tpu_custom_call.1} parent=1 // pred_check_branch
      %37 = sbr.rel (0) target = $region9
    $region8: #{tpu_custom_call.1} parent=1 // pred_region
      _
    $region9: #{tpu_custom_call.1} parent=1 // pred_fallthru
      _
    // Predicated region
    $region10: #{tpu_custom_call.1} parent=1 // pred_check
      _
    $region11: #{tpu_custom_call.1} parent=1 // pred_check_branch
      %39 = sbr.rel (0) target = $region13
    $region12: #{tpu_custom_call.1} parent=1 // pred_region
      %s41 = ssub.s32 16, 16
      %42 = vsyncadd [#allocation6], %s41
      %s44 = sshll.u32 [#allocation5], 4
      %s45 = int_to_ptr.vmem [resolvable:$true] %s44
      %47 = dma.hbm_to_vmem [thread:$0]  %s2, 16, %s45, [#allocation6]
    $region13: #{tpu_custom_call.1} parent=1 // pred_fallthru
      _
    // Predicated region
    $region14: #{tpu_custom_call.1} parent=1 // pred_check
      _
    $region15: #{tpu_custom_call.1} parent=1 // pred_check_branch
      %49 = sbr.rel (0) target = $region17
    $region16: #{tpu_custom_call.1} parent=1 // pred_region
      _
    $region17: #{tpu_custom_call.1} parent=1 // pred_fallthru
      _
    // Predicated region
    $region18: #{tpu_custom_call.1} parent=1 // pred_check
      _
    $region19: #{tpu_custom_call.1} parent=1 // pred_check_branch
      %51 = sbr.rel (0) target = $region21
    $region20: #{tpu_custom_call.1} parent=1 // pred_region
      %s53 = ssub.s32 32, 32
      %54 = vsyncadd [#allocation6], %s53
      %s56 = sshll.u32 [#allocation7], 4
      %s57 = int_to_ptr.vmem [resolvable:$true] %s56
      %59 = dma.hbm_to_vmem [thread:$0]  %s4, 32, %s57, [#allocation6]
    $region21: #{tpu_custom_call.1} parent=1 // pred_fallthru
      _
    // Predicated region
    $region22: #{tpu_custom_call.1} parent=1 // pred_check
      _
    $region23: #{tpu_custom_call.1} parent=1 // pred_check_branch
      %61 = sbr.rel (0) target = $region25
    $region24: #{tpu_custom_call.1} parent=1 // pred_region
      _
    $region25: #{tpu_custom_call.1} parent=1 // pred_fallthru
      _
    // Predicated region
    $region26: #{tpu_custom_call.1} parent=1 // pred_check
      _
    $region27: #{tpu_custom_call.1} parent=1 // pred_check_branch
      %63 = sbr.rel (0) target = $region29
    $region28: #{tpu_custom_call.1} parent=1 // pred_region
      %s65 = ssub.s32 16, 16
      %66 = vsyncadd [#allocation9], %s65
      %s68 = sshll.u32 [#allocation8], 4
      %s69 = int_to_ptr.vmem [resolvable:$true] %s68
      %71 = dma.hbm_to_vmem [thread:$0]  %s6, 16, %s69, [#allocation9]
    $region29: #{tpu_custom_call.1} parent=1 // pred_fallthru
      _
    // Predicated region
    $region30: #{tpu_custom_call.1} parent=1 // pred_check
      _
    $region31: #{tpu_custom_call.1} parent=1 // pred_check_branch
      %73 = sbr.rel (0) target = $region33
    $region32: #{tpu_custom_call.1} parent=1 // pred_region
      %s75 = ssub.s32 16, 16
      %76 = vsyncadd [#allocation9], %s75
      %s78 = sshll.u32 [#allocation10], 4
      %s79 = int_to_ptr.vmem [resolvable:$true] %s78
      %81 = dma.hbm_to_vmem [thread:$0]  %s7, 16, %s79, [#allocation9]
    $region33: #{tpu_custom_call.1} parent=1 // pred_fallthru
      _
    // Predicated region
    $region34: #{tpu_custom_call.1} parent=1 // pred_check
      _
    $region35: #{tpu_custom_call.1} parent=1 // pred_check_branch
      %83 = sbr.rel (0) target = $region37
    $region36: #{tpu_custom_call.1} parent=1 // pred_region
      %s85 = ssub.s32 16, 16
      %86 = vsyncadd [#allocation12], %s85
      %s88 = sshll.u32 [#allocation11], 4
      %s89 = int_to_ptr.vmem [resolvable:$true] %s88
      %91 = dma.hbm_to_vmem [thread:$0]  %s8, 16, %s89, [#allocation12]
    $region37: #{tpu_custom_call.1} parent=1 // pred_fallthru
      _
    // Predicated region
    $region38: #{tpu_custom_call.1} parent=1 // pred_check
      _
    $region39: #{tpu_custom_call.1} parent=1 // pred_check_branch
      %93 = sbr.rel (0) target = $region41
    $region40: #{tpu_custom_call.1} parent=1 // pred_region
      _
    $region41: #{tpu_custom_call.1} parent=1 // pred_fallthru
      _
    // Predicated region
    $region42: #{tpu_custom_call.1} parent=1 // pred_check
      _
    $region43: #{tpu_custom_call.1} parent=1 // pred_check_branch
      %95 = sbr.rel (0) target = $region45
    $region44: #{tpu_custom_call.1} parent=1 // pred_region
      _
    $region45: #{tpu_custom_call.1} parent=1 // pred_fallthru
      _
    // Predicated region
    $region46: #{tpu_custom_call.1} parent=1 // pred_check
      _
    $region47: #{tpu_custom_call.1} parent=1 // pred_check_branch
      %97 = sbr.rel (0) target = $region49
    $region48: #{tpu_custom_call.1} parent=1 // pred_region
      %s99 = ssub.s32 1024, 1024
      %100 = vsyncadd [#allocation12], %s99
      %s101 = sshll.u32 [#allocation13], 4
      %s102 = int_to_ptr.vmem [resolvable:$true] %s101
      %107 = dma.hbm_to_vmem [thread:$0]  %s11, 1024, %s102, [#allocation12], 64, 64, 4
    $region49: #{tpu_custom_call.1} parent=1 // pred_fallthru
      _
    // Predicated region
    $region50: #{tpu_custom_call.1} parent=1 // pred_check
      _
    $region51: #{tpu_custom_call.1} parent=1 // pred_check_branch
      %109 = sbr.rel (0) target = $region53
    $region52: #{tpu_custom_call.1} parent=1 // pred_region
      _
    $region53: #{tpu_custom_call.1} parent=1 // pred_fallthru
      _
    // Predicated region
    $region54: #{tpu_custom_call.1} parent=1 // pred_check
      _
    $region55: #{tpu_custom_call.1} parent=1 // pred_check_branch
      %111 = sbr.rel (0) target = $region57
    $region56: #{tpu_custom_call.1} parent=1 // pred_region
      _
    $region57: #{tpu_custom_call.1} parent=1 // pred_fallthru
      _
    // Predicated region
    $region58: #{tpu_custom_call.1} parent=1 // pred_check
      _
    $region59: #{tpu_custom_call.1} parent=1 // pred_check_branch
      %113 = sbr.rel (0) target = $region61
    $region60: #{tpu_custom_call.1} parent=1 // pred_region
      %114 = dma.done [#allocation3], 1024
    $region61: #{tpu_custom_call.1} parent=1 // pred_fallthru
      _
    // Predicated region
    $region62: #{tpu_custom_call.1} parent=1 // pred_check
      _
    $region63: #{tpu_custom_call.1} parent=1 // pred_check_branch
      %116 = sbr.rel (0) target = $region65
    $region64: #{tpu_custom_call.1} parent=1 // pred_region
      %117 = dma.done [#allocation6], 16
    $region65: #{tpu_custom_call.1} parent=1 // pred_fallthru
      _
    // Predicated region
    $region66: #{tpu_custom_call.1} parent=1 // pred_check
      _
    $region67: #{tpu_custom_call.1} parent=1 // pred_check_branch
      %119 = sbr.rel (0) target = $region69
    $region68: #{tpu_custom_call.1} parent=1 // pred_region
      %120 = dma.done [#allocation6], 32
    $region69: #{tpu_custom_call.1} parent=1 // pred_fallthru
      _
    // Predicated region
    $region70: #{tpu_custom_call.1} parent=1 // pred_check
      _
    $region71: #{tpu_custom_call.1} parent=1 // pred_check_branch
      %122 = sbr.rel (0) target = $region73
    $region72: #{tpu_custom_call.1} parent=1 // pred_region
      %123 = dma.done [#allocation9], 16
    $region73: #{tpu_custom_call.1} parent=1 // pred_fallthru
      _
    // Predicated region
    $region74: #{tpu_custom_call.1} parent=1 // pred_check
      _
    $region75: #{tpu_custom_call.1} parent=1 // pred_check_branch
      %125 = sbr.rel (0) target = $region77
    $region76: #{tpu_custom_call.1} parent=1 // pred_region
      %126 = dma.done [#allocation9], 16
    $region77: #{tpu_custom_call.1} parent=1 // pred_fallthru
      _
    // Predicated region
    $region78: #{tpu_custom_call.1} parent=1 // pred_check
      _
    $region79: #{tpu_custom_call.1} parent=1 // pred_check_branch
      %128 = sbr.rel (0) target = $region81
    $region80: #{tpu_custom_call.1} parent=1 // pred_region
      %129 = dma.done [#allocation12], 16
    $region81: #{tpu_custom_call.1} parent=1 // pred_fallthru
      _
    // Predicated region
    $region82: #{tpu_custom_call.1} parent=1 // pred_check
      _
    $region83: #{tpu_custom_call.1} parent=1 // pred_check_branch
      %131 = sbr.rel (0) target = $region85
    $region84: #{tpu_custom_call.1} parent=1 // pred_region
      %132 = dma.done [#allocation12], 1024
    $region85: #{tpu_custom_call.1} parent=1 // pred_fallthru
      _
    %v134 = vld [vmem:[#allocation2] sm:$0xf]
    %v135 = vld [vmem:[#allocation2 + $0x4] sm:$0xf]
    %v136 = vld [vmem:[#allocation2 + $0x8] sm:$0xf]
    %v137 = vld [vmem:[#allocation2 + $0xc] sm:$0xf]
    %v138 = vld [vmem:[#allocation2 + $0x10] sm:$0xf]
    %v139 = vld [vmem:[#allocation2 + $0x14] sm:$0xf]
    %v140 = vld [vmem:[#allocation2 + $0x18] sm:$0xf]
    %v141 = vld [vmem:[#allocation2 + $0x1c] sm:$0xf]
    %v142 = vld [vmem:[#allocation2 + $0x20] sm:$0xf]
    %v143 = vld [vmem:[#allocation2 + $0x24] sm:$0xf]
    %v144 = vld [vmem:[#allocation2 + $0x28] sm:$0xf]
    %v145 = vld [vmem:[#allocation2 + $0x2c] sm:$0xf]
    %v146 = vld [vmem:[#allocation2 + $0x30] sm:$0xf]
    %v147 = vld [vmem:[#allocation2 + $0x34] sm:$0xf]
    %v148 = vld [vmem:[#allocation2 + $0x38] sm:$0xf]
    %v149 = vld [vmem:[#allocation2 + $0x3c] sm:$0xf]
    %v150 = vld [vmem:[%s1] sm:$0xf]
    %v151 = vld [vmem:[%s1 + $0x4] sm:$0xf]
    %v152 = vld [vmem:[%s1 + $0x8] sm:$0xf]
    %v153 = vld [vmem:[%s1 + $0xc] sm:$0xf]
    %v154 = vld [vmem:[#allocation5] sm:$0x1]
    %v156 = vlaneseq
    %v157 = vshrl.u32 %v156, 7
    %v158 = vsub.s32 0, %v157
    %v159 = vrot.slane %v154, %v158
    %v177 = vunpack.c.l.b16 %v134
    %v178 = vunpack.c.l.b16 %v135
    %v179 = vunpack.c.l.b16 %v136
    %v180 = vunpack.c.l.b16 %v137
    %v181 = vunpack.c.l.b16 %v138
    %v182 = vunpack.c.l.b16 %v139
    %v183 = vunpack.c.l.b16 %v140
    %v184 = vunpack.c.l.b16 %v141
    %v185 = vunpack.c.l.b16 %v142
    %v186 = vunpack.c.l.b16 %v143
    %v187 = vunpack.c.l.b16 %v144
    %v188 = vunpack.c.l.b16 %v145
    %v189 = vunpack.c.l.b16 %v146
    %v190 = vunpack.c.l.b16 %v147
    %v191 = vunpack.c.l.b16 %v148
    %v192 = vunpack.c.l.b16 %v149
    %v193 = vpack.c.b16 %v178, %v177
    %v194 = vpack.c.b16 %v180, %v179
    %v195 = vpack.c.b16 %v182, %v181
    %v196 = vpack.c.b16 %v184, %v183
    %v197 = vpack.c.b16 %v186, %v185
    %v198 = vpack.c.b16 %v188, %v187
    %v199 = vpack.c.b16 %v190, %v189
    %v200 = vpack.c.b16 %v192, %v191
    %v205 = vunpack.c.l.b16 %v150
    %v206 = vunpack.c.l.b16 %v151
    %v207 = vunpack.c.l.b16 %v152
    %v208 = vunpack.c.l.b16 %v153
    %v209 = vpack.c.b16 %v206, %v205
    %v210 = vpack.c.b16 %v208, %v207
    %vm213 = vcmask 261120
    %v215 = vsel %vm213, %v193, 0
    %v218 = vsel %vm213, %v194, 0
    %v221 = vsel %vm213, %v195, 0
    %v224 = vsel %vm213, %v196, 0
    %v227 = vsel %vm213, %v197, 0
    %v230 = vsel %vm213, %v198, 0
    %v233 = vsel %vm213, %v199, 0
    %v236 = vsel %vm213, %v200, 0
    %238 = vmatprep.subr.bf16.mxu0 0
    %239 = vmatpush1.bf16.msra.mxu0 %v209
    %240 = vmatprep.subr.bf16.mxu0 0
    %241 = vmatpush1.bf16.msra.mxu0 %v210
    %242 = vmatprep.subr.bf16.mxu0 0
    %243 = vmatpush1.bf16.msra.mxu0 0
    %244 = vmatprep.subr.bf16.mxu0 0
    %245 = vmatpush1.bf16.msra.mxu0 0
    %246 = vmatprep.subr.bf16.mxu0 0
    %247 = vmatpush1.bf16.msra.mxu0 0
    %248 = vmatprep.subr.bf16.mxu0 0
    %249 = vmatpush1.bf16.msra.mxu0 0
    %250 = vmatprep.subr.bf16.mxu0 0
    %251 = vmatpush1.bf16.msra.mxu0 0
    %252 = vmatprep.subr.bf16.mxu0 0
    %253 = vmatpush1.bf16.msra.mxu0 0
    %254 = vmatprep.subr.bf16.mxu0 0
    %255 = vmatpush1.bf16.msra.mxu0 0
    %256 = vmatprep.subr.bf16.mxu0 0
    %257 = vmatpush1.bf16.msra.mxu0 0
    %258 = vmatprep.subr.bf16.mxu0 0
    %259 = vmatpush1.bf16.msra.mxu0 0
    %260 = vmatprep.subr.bf16.mxu0 0
    %261 = vmatpush1.bf16.msra.mxu0 0
    %262 = vmatprep.subr.bf16.mxu0 0
    %263 = vmatpush1.bf16.msra.mxu0 0
    %264 = vmatprep.subr.bf16.mxu0 0
    %265 = vmatpush1.bf16.msra.mxu0 0
    %266 = vmatprep.subr.bf16.mxu0 0
    %267 = vmatpush1.bf16.msra.mxu0 0
    %268 = vmatprep.subr.bf16.mxu0 0
    %269 = vmatpush1.bf16.msra.mxu0 0
    %270 = vmatprep.mubr.bf16.mxu0 0
    %271 = vmatmul.mubr.bf16.gmra.mrb[0].mxu0 %v215
    %v272 = vpop.f32.mrb[0].mxu0
    %v273 = vadd.f32 %v159, %v272
    %v274 = vpop.f32.mrb[0].mxu0
    %v275 = vpop.f32.mrb[0].mxu0
    %v276 = vadd.f32 %v159, %v275
    %v277 = vpop.f32.mrb[0].mxu0
    %278 = vmatprep.mubr.bf16.mxu0 0
    %279 = vmatmul.mubr.bf16.gmra.mrb[0].mxu0 %v218
    %v280 = vpop.f32.mrb[0].mxu0
    %v281 = vadd.f32 %v159, %v280
    %v282 = vpop.f32.mrb[0].mxu0
    %v283 = vpop.f32.mrb[0].mxu0
    %v284 = vadd.f32 %v159, %v283
    %v285 = vpop.f32.mrb[0].mxu0
    %286 = vmatprep.mubr.bf16.mxu0 0
    %287 = vmatmul.mubr.bf16.gmra.mrb[0].mxu0 %v221
    %v288 = vpop.f32.mrb[0].mxu0
    %v289 = vadd.f32 %v159, %v288
    %v290 = vpop.f32.mrb[0].mxu0
    %v291 = vpop.f32.mrb[0].mxu0
    %v292 = vadd.f32 %v159, %v291
    %v293 = vpop.f32.mrb[0].mxu0
    %294 = vmatprep.mubr.bf16.mxu0 0
    %295 = vmatmul.mubr.bf16.gmra.mrb[0].mxu0 %v224
    %v296 = vpop.f32.mrb[0].mxu0
    %v297 = vadd.f32 %v159, %v296
    %v298 = vpop.f32.mrb[0].mxu0
    %v299 = vpop.f32.mrb[0].mxu0
    %v300 = vadd.f32 %v159, %v299
    %v301 = vpop.f32.mrb[0].mxu0
    %302 = vmatprep.mubr.bf16.mxu0 0
    %303 = vmatmul.mubr.bf16.gmra.mrb[0].mxu0 %v227
    %v304 = vpop.f32.mrb[0].mxu0
    %v305 = vadd.f32 %v159, %v304
    %v306 = vpop.f32.mrb[0].mxu0
    %v307 = vpop.f32.mrb[0].mxu0
    %v308 = vadd.f32 %v159, %v307
    %v309 = vpop.f32.mrb[0].mxu0
    %310 = vmatprep.mubr.bf16.mxu0 0
    %311 = vmatmul.mubr.bf16.gmra.mrb[0].mxu0 %v230
    %v312 = vpop.f32.mrb[0].mxu0
    %v313 = vadd.f32 %v159, %v312
    %v314 = vpop.f32.mrb[0].mxu0
    %v315 = vpop.f32.mrb[0].mxu0
    %v316 = vadd.f32 %v159, %v315
    %v317 = vpop.f32.mrb[0].mxu0
    %318 = vmatprep.mubr.bf16.mxu0 0
    %319 = vmatmul.mubr.bf16.gmra.mrb[0].mxu0 %v233
    %v320 = vpop.f32.mrb[0].mxu0
    %v321 = vadd.f32 %v159, %v320
    %v322 = vpop.f32.mrb[0].mxu0
    %v323 = vpop.f32.mrb[0].mxu0
    %v324 = vadd.f32 %v159, %v323
    %v325 = vpop.f32.mrb[0].mxu0
    %326 = vmatprep.mubr.bf16.mxu0 0
    %327 = vmatmul.mubr.bf16.gmra.mrb[0].mxu0 %v236
    %v328 = vpop.f32.mrb[0].mxu0
    %v329 = vadd.f32 %v159, %v328
    %v330 = vpop.f32.mrb[0].mxu0
    %v331 = vpop.f32.mrb[0].mxu0
    %v332 = vadd.f32 %v159, %v331
    %v333 = vpop.f32.mrb[0].mxu0
    %334 = vdwg.mxu0
    %v335 = vpack.c.bf16 %v276, %v273
    %v336 = vpack.c.bf16 %v284, %v281
    %v337 = vpack.c.bf16 %v292, %v289
    %v338 = vpack.c.bf16 %v300, %v297
    %v339 = vpack.c.bf16 %v308, %v305
    %v340 = vpack.c.bf16 %v316, %v313
    %v341 = vpack.c.bf16 %v324, %v321
    %v342 = vpack.c.bf16 %v332, %v329
    %v343 = vld [vmem:[%s3] sm:$0xf]
    %v344 = vld [vmem:[%s3 + $0x4] sm:$0xf]
    %v345 = vld [vmem:[%s3 + $0x8] sm:$0xf]
    %v346 = vld [vmem:[%s3 + $0xc] sm:$0xf]
    %v351 = vunpack.c.l.b16 %v343
    %v352 = vunpack.c.l.b16 %v344
    %v353 = vunpack.c.l.b16 %v345
    %v354 = vunpack.c.l.b16 %v346
    %v355 = vpack.c.b16 %v352, %v351
    %v356 = vpack.c.b16 %v354, %v353
    %v360 = vsel %vm213, %v335, 0
    %v363 = vsel %vm213, %v336, 0
    %v366 = vsel %vm213, %v337, 0
    %v369 = vsel %vm213, %v338, 0
    %v372 = vsel %vm213, %v339, 0
    %v375 = vsel %vm213, %v340, 0
    %v378 = vsel %vm213, %v341, 0
    %v381 = vsel %vm213, %v342, 0
    %383 = vmatprep.subr.bf16.mxu0 0
    %384 = vmatpush1.bf16.msra.mxu0 %v355
    %385 = vmatprep.subr.bf16.mxu0 0
    %386 = vmatpush1.bf16.msra.mxu0 %v356
    %387 = vmatprep.subr.bf16.mxu0 0
    %388 = vmatpush1.bf16.msra.mxu0 0
    %389 = vmatprep.subr.bf16.mxu0 0
    %390 = vmatpush1.bf16.msra.mxu0 0
    %391 = vmatprep.subr.bf16.mxu0 0
    %392 = vmatpush1.bf16.msra.mxu0 0
    %393 = vmatprep.subr.bf16.mxu0 0
    %394 = vmatpush1.bf16.msra.mxu0 0
    %395 = vmatprep.subr.bf16.mxu0 0
    %396 = vmatpush1.bf16.msra.mxu0 0
    %397 = vmatprep.subr.bf16.mxu0 0
    %398 = vmatpush1.bf16.msra.mxu0 0
    %399 = vmatprep.subr.bf16.mxu0 0
    %400 = vmatpush1.bf16.msra.mxu0 0
    %401 = vmatprep.subr.bf16.mxu0 0
    %402 = vmatpush1.bf16.msra.mxu0 0
    %403 = vmatprep.subr.bf16.mxu0 0
    %404 = vmatpush1.bf16.msra.mxu0 0
    %405 = vmatprep.subr.bf16.mxu0 0
    %406 = vmatpush1.bf16.msra.mxu0 0
    %407 = vmatprep.subr.bf16.mxu0 0
    %408 = vmatpush1.bf16.msra.mxu0 0
    %409 = vmatprep.subr.bf16.mxu0 0
    %410 = vmatpush1.bf16.msra.mxu0 0
    %411 = vmatprep.subr.bf16.mxu0 0
    %412 = vmatpush1.bf16.msra.mxu0 0
    %413 = vmatprep.subr.bf16.mxu0 0
    %414 = vmatpush1.bf16.msra.mxu0 0
    %415 = vmatprep.mubr.bf16.mxu0 0
    %416 = vmatmul.mubr.bf16.gmra.mrb[0].mxu0 %v360
    %v417 = vpop.f32.mrb[0].mxu0
    %v418 = vadd.f32 0.0, %v417
    %v419 = vpop.f32.mrb[0].mxu0
    %v420 = vpop.f32.mrb[0].mxu0
    %v421 = vadd.f32 0.0, %v420
    %v422 = vpop.f32.mrb[0].mxu0
    %423 = vmatprep.mubr.bf16.mxu0 0
    %424 = vmatmul.mubr.bf16.gmra.mrb[0].mxu0 %v363
    %v425 = vpop.f32.mrb[0].mxu0
    %v426 = vadd.f32 0.0, %v425
    %v427 = vpop.f32.mrb[0].mxu0
    %v428 = vpop.f32.mrb[0].mxu0
    %v429 = vadd.f32 0.0, %v428
    %v430 = vpop.f32.mrb[0].mxu0
    %431 = vmatprep.mubr.bf16.mxu0 0
    %432 = vmatmul.mubr.bf16.gmra.mrb[0].mxu0 %v366
    %v433 = vpop.f32.mrb[0].mxu0
    %v434 = vadd.f32 0.0, %v433
    %v435 = vpop.f32.mrb[0].mxu0
    %v436 = vpop.f32.mrb[0].mxu0
    %v437 = vadd.f32 0.0, %v436
    %v438 = vpop.f32.mrb[0].mxu0
    %439 = vmatprep.mubr.bf16.mxu0 0
    %440 = vmatmul.mubr.bf16.gmra.mrb[0].mxu0 %v369
    %v441 = vpop.f32.mrb[0].mxu0
    %v442 = vadd.f32 0.0, %v441
    %v443 = vpop.f32.mrb[0].mxu0
    %v444 = vpop.f32.mrb[0].mxu0
    %v445 = vadd.f32 0.0, %v444
    %v446 = vpop.f32.mrb[0].mxu0
    %447 = vmatprep.mubr.bf16.mxu0 0
    %448 = vmatmul.mubr.bf16.gmra.mrb[0].mxu0 %v372
    %v449 = vpop.f32.mrb[0].mxu0
    %v450 = vadd.f32 0.0, %v449
    %v451 = vpop.f32.mrb[0].mxu0
    %v452 = vpop.f32.mrb[0].mxu0
    %v453 = vadd.f32 0.0, %v452
    %v454 = vpop.f32.mrb[0].mxu0
    %455 = vmatprep.mubr.bf16.mxu0 0
    %456 = vmatmul.mubr.bf16.gmra.mrb[0].mxu0 %v375
    %v457 = vpop.f32.mrb[0].mxu0
    %v458 = vadd.f32 0.0, %v457
    %v459 = vpop.f32.mrb[0].mxu0
    %v460 = vpop.f32.mrb[0].mxu0
    %v461 = vadd.f32 0.0, %v460
    %v462 = vpop.f32.mrb[0].mxu0
    %463 = vmatprep.mubr.bf16.mxu0 0
    %464 = vmatmul.mubr.bf16.gmra.mrb[0].mxu0 %v378
    %v465 = vpop.f32.mrb[0].mxu0
    %v466 = vadd.f32 0.0, %v465
    %v467 = vpop.f32.mrb[0].mxu0
    %v468 = vpop.f32.mrb[0].mxu0
    %v469 = vadd.f32 0.0, %v468
    %v470 = vpop.f32.mrb[0].mxu0
    %471 = vmatprep.mubr.bf16.mxu0 0
    %472 = vmatmul.mubr.bf16.gmra.mrb[0].mxu0 %v381
    %v473 = vpop.f32.mrb[0].mxu0
    %v474 = vadd.f32 0.0, %v473
    %v475 = vpop.f32.mrb[0].mxu0
    %v476 = vpop.f32.mrb[0].mxu0
    %v477 = vadd.f32 0.0, %v476
    %v478 = vpop.f32.mrb[0].mxu0
    %479 = vdwg.mxu0
    %vm480 = vcmask 31744
    %v481 = vsel %vm480, %v418, -inf
    %v482 = vrot.slane %v481, 4
    %v483 = vmax.f32 %v481, %v482
    %v484 = vrot.slane %v483, 2
    %v485 = vmax.f32 %v483, %v484
    %v486 = vrot.slane %v485, 1
    %v487 = vmax.f32 %v485, %v486
    %v488 = vsel %vm480, %v421, -inf
    %v489 = vrot.slane %v488, 4
    %v490 = vmax.f32 %v488, %v489
    %v491 = vrot.slane %v490, 2
    %v492 = vmax.f32 %v490, %v491
    %v493 = vrot.slane %v492, 1
    %v494 = vmax.f32 %v492, %v493
    %v495 = vsel %vm480, %v426, -inf
    %v496 = vrot.slane %v495, 4
    %v497 = vmax.f32 %v495, %v496
    %v498 = vrot.slane %v497, 2
    %v499 = vmax.f32 %v497, %v498
    %v500 = vrot.slane %v499, 1
    %v501 = vmax.f32 %v499, %v500
    %v502 = vsel %vm480, %v429, -inf
    %v503 = vrot.slane %v502, 4
    %v504 = vmax.f32 %v502, %v503
    %v505 = vrot.slane %v504, 2
    %v506 = vmax.f32 %v504, %v505
    %v507 = vrot.slane %v506, 1
    %v508 = vmax.f32 %v506, %v507
    %v509 = vsel %vm480, %v434, -inf
    %v510 = vrot.slane %v509, 4
    %v511 = vmax.f32 %v509, %v510
    %v512 = vrot.slane %v511, 2
    %v513 = vmax.f32 %v511, %v512
    %v514 = vrot.slane %v513, 1
    %v515 = vmax.f32 %v513, %v514
    %v516 = vsel %vm480, %v437, -inf
    %v517 = vrot.slane %v516, 4
    %v518 = vmax.f32 %v516, %v517
    %v519 = vrot.slane %v518, 2
    %v520 = vmax.f32 %v518, %v519
    %v521 = vrot.slane %v520, 1
    %v522 = vmax.f32 %v520, %v521
    %v523 = vsel %vm480, %v442, -inf
    %v524 = vrot.slane %v523, 4
    %v525 = vmax.f32 %v523, %v524
    %v526 = vrot.slane %v525, 2
    %v527 = vmax.f32 %v525, %v526
    %v528 = vrot.slane %v527, 1
    %v529 = vmax.f32 %v527, %v528
    %v530 = vsel %vm480, %v445, -inf
    %v531 = vrot.slane %v530, 4
    %v532 = vmax.f32 %v530, %v531
    %v533 = vrot.slane %v532, 2
    %v534 = vmax.f32 %v532, %v533
    %v535 = vrot.slane %v534, 1
    %v536 = vmax.f32 %v534, %v535
    %v537 = vsel %vm480, %v450, -inf
    %v538 = vrot.slane %v537, 4
    %v539 = vmax.f32 %v537, %v538
    %v540 = vrot.slane %v539, 2
    %v541 = vmax.f32 %v539, %v540
    %v542 = vrot.slane %v541, 1
    %v543 = vmax.f32 %v541, %v542
    %v544 = vsel %vm480, %v453, -inf
    %v545 = vrot.slane %v544, 4
    %v546 = vmax.f32 %v544, %v545
    %v547 = vrot.slane %v546, 2
    %v548 = vmax.f32 %v546, %v547
    %v549 = vrot.slane %v548, 1
    %v550 = vmax.f32 %v548, %v549
    %v551 = vsel %vm480, %v458, -inf
    %v552 = vrot.slane %v551, 4
    %v553 = vmax.f32 %v551, %v552
    %v554 = vrot.slane %v553, 2
    %v555 = vmax.f32 %v553, %v554
    %v556 = vrot.slane %v555, 1
    %v557 = vmax.f32 %v555, %v556
    %v558 = vsel %vm480, %v461, -inf
    %v559 = vrot.slane %v558, 4
    %v560 = vmax.f32 %v558, %v559
    %v561 = vrot.slane %v560, 2
    %v562 = vmax.f32 %v560, %v561
    %v563 = vrot.slane %v562, 1
    %v564 = vmax.f32 %v562, %v563
    %v565 = vsel %vm480, %v466, -inf
    %v566 = vrot.slane %v565, 4
    %v567 = vmax.f32 %v565, %v566
    %v568 = vrot.slane %v567, 2
    %v569 = vmax.f32 %v567, %v568
    %v570 = vrot.slane %v569, 1
    %v571 = vmax.f32 %v569, %v570
    %v572 = vsel %vm480, %v469, -inf
    %v573 = vrot.slane %v572, 4
    %v574 = vmax.f32 %v572, %v573
    %v575 = vrot.slane %v574, 2
    %v576 = vmax.f32 %v574, %v575
    %v577 = vrot.slane %v576, 1
    %v578 = vmax.f32 %v576, %v577
    %v579 = vsel %vm480, %v474, -inf
    %v580 = vrot.slane %v579, 4
    %v581 = vmax.f32 %v579, %v580
    %v582 = vrot.slane %v581, 2
    %v583 = vmax.f32 %v581, %v582
    %v584 = vrot.slane %v583, 1
    %v585 = vmax.f32 %v583, %v584
    %v586 = vsel %vm480, %v477, -inf
    %v587 = vrot.slane %v586, 4
    %v588 = vmax.f32 %v586, %v587
    %v589 = vrot.slane %v588, 2
    %v590 = vmax.f32 %v588, %v589
    %v591 = vrot.slane %v590, 1
    %v592 = vmax.f32 %v590, %v591
    %v593 = vsub.f32 %v418, %v487
    %v594 = vsub.f32 %v421, %v494
    %v595 = vsub.f32 %v426, %v501
    %v596 = vsub.f32 %v429, %v508
    %v597 = vsub.f32 %v434, %v515
    %v598 = vsub.f32 %v437, %v522
    %v599 = vsub.f32 %v442, %v529
    %v600 = vsub.f32 %v445, %v536
    %v601 = vsub.f32 %v450, %v543
    %v602 = vsub.f32 %v453, %v550
    %v603 = vsub.f32 %v458, %v557
    %v604 = vsub.f32 %v461, %v564
    %v605 = vsub.f32 %v466, %v571
    %v606 = vsub.f32 %v469, %v578
    %v607 = vsub.f32 %v474, %v585
    %v608 = vsub.f32 %v477, %v592
    %v609 = vmul.f32 %v593, 1.442695
    %v610 = vpow.pop %v609
    %v611 = vmul.f32 %v594, 1.442695
    %v612 = vpow.pop %v611
    %v613 = vmul.f32 %v595, 1.442695
    %v614 = vpow.pop %v613
    %v615 = vmul.f32 %v596, 1.442695
    %v616 = vpow.pop %v615
    %v617 = vmul.f32 %v597, 1.442695
    %v618 = vpow.pop %v617
    %v619 = vmul.f32 %v598, 1.442695
    %v620 = vpow.pop %v619
    %v621 = vmul.f32 %v599, 1.442695
    %v622 = vpow.pop %v621
    %v623 = vmul.f32 %v600, 1.442695
    %v624 = vpow.pop %v623
    %v625 = vmul.f32 %v601, 1.442695
    %v626 = vpow.pop %v625
    %v627 = vmul.f32 %v602, 1.442695
    %v628 = vpow.pop %v627
    %v629 = vmul.f32 %v603, 1.442695
    %v630 = vpow.pop %v629
    %v631 = vmul.f32 %v604, 1.442695
    %v632 = vpow.pop %v631
    %v633 = vmul.f32 %v605, 1.442695
    %v634 = vpow.pop %v633
    %v635 = vmul.f32 %v606, 1.442695
    %v636 = vpow.pop %v635
    %v637 = vmul.f32 %v607, 1.442695
    %v638 = vpow.pop %v637
    %v639 = vmul.f32 %v608, 1.442695
    %v640 = vpow.pop %v639
    %v641 = vsel %vm480, %v610, 0.0
    %v642 = vrot.slane %v641, 4
    %v643 = vadd.f32 %v641, %v642
    %v644 = vrot.slane %v643, 2
    %v645 = vadd.f32 %v643, %v644
    %v646 = vrot.slane %v645, 1
    %v647 = vadd.f32 %v645, %v646
    %v648 = vsel %vm480, %v612, 0.0
    %v649 = vrot.slane %v648, 4
    %v650 = vadd.f32 %v648, %v649
    %v651 = vrot.slane %v650, 2
    %v652 = vadd.f32 %v650, %v651
    %v653 = vrot.slane %v652, 1
    %v654 = vadd.f32 %v652, %v653
    %v655 = vsel %vm480, %v614, 0.0
    %v656 = vrot.slane %v655, 4
    %v657 = vadd.f32 %v655, %v656
    %v658 = vrot.slane %v657, 2
    %v659 = vadd.f32 %v657, %v658
    %v660 = vrot.slane %v659, 1
    %v661 = vadd.f32 %v659, %v660
    %v662 = vsel %vm480, %v616, 0.0
    %v663 = vrot.slane %v662, 4
    %v664 = vadd.f32 %v662, %v663
    %v665 = vrot.slane %v664, 2
    %v666 = vadd.f32 %v664, %v665
    %v667 = vrot.slane %v666, 1
    %v668 = vadd.f32 %v666, %v667
    %v669 = vsel %vm480, %v618, 0.0
    %v670 = vrot.slane %v669, 4
    %v671 = vadd.f32 %v669, %v670
    %v672 = vrot.slane %v671, 2
    %v673 = vadd.f32 %v671, %v672
    %v674 = vrot.slane %v673, 1
    %v675 = vadd.f32 %v673, %v674
    %v676 = vsel %vm480, %v620, 0.0
    %v677 = vrot.slane %v676, 4
    %v678 = vadd.f32 %v676, %v677
    %v679 = vrot.slane %v678, 2
    %v680 = vadd.f32 %v678, %v679
    %v681 = vrot.slane %v680, 1
    %v682 = vadd.f32 %v680, %v681
    %v683 = vsel %vm480, %v622, 0.0
    %v684 = vrot.slane %v683, 4
    %v685 = vadd.f32 %v683, %v684
    %v686 = vrot.slane %v685, 2
    %v687 = vadd.f32 %v685, %v686
    %v688 = vrot.slane %v687, 1
    %v689 = vadd.f32 %v687, %v688
    %v690 = vsel %vm480, %v624, 0.0
    %v691 = vrot.slane %v690, 4
    %v692 = vadd.f32 %v690, %v691
    %v693 = vrot.slane %v692, 2
    %v694 = vadd.f32 %v692, %v693
    %v695 = vrot.slane %v694, 1
    %v696 = vadd.f32 %v694, %v695
    %v697 = vsel %vm480, %v626, 0.0
    %v698 = vrot.slane %v697, 4
    %v699 = vadd.f32 %v697, %v698
    %v700 = vrot.slane %v699, 2
    %v701 = vadd.f32 %v699, %v700
    %v702 = vrot.slane %v701, 1
    %v703 = vadd.f32 %v701, %v702
    %v704 = vsel %vm480, %v628, 0.0
    %v705 = vrot.slane %v704, 4
    %v706 = vadd.f32 %v704, %v705
    %v707 = vrot.slane %v706, 2
    %v708 = vadd.f32 %v706, %v707
    %v709 = vrot.slane %v708, 1
    %v710 = vadd.f32 %v708, %v709
    %v711 = vsel %vm480, %v630, 0.0
    %v712 = vrot.slane %v711, 4
    %v713 = vadd.f32 %v711, %v712
    %v714 = vrot.slane %v713, 2
    %v715 = vadd.f32 %v713, %v714
    %v716 = vrot.slane %v715, 1
    %v717 = vadd.f32 %v715, %v716
    %v718 = vsel %vm480, %v632, 0.0
    %v719 = vrot.slane %v718, 4
    %v720 = vadd.f32 %v718, %v719
    %v721 = vrot.slane %v720, 2
    %v722 = vadd.f32 %v720, %v721
    %v723 = vrot.slane %v722, 1
    %v724 = vadd.f32 %v722, %v723
    %v725 = vsel %vm480, %v634, 0.0
    %v726 = vrot.slane %v725, 4
    %v727 = vadd.f32 %v725, %v726
    %v728 = vrot.slane %v727, 2
    %v729 = vadd.f32 %v727, %v728
    %v730 = vrot.slane %v729, 1
    %v731 = vadd.f32 %v729, %v730
    %v732 = vsel %vm480, %v636, 0.0
    %v733 = vrot.slane %v732, 4
    %v734 = vadd.f32 %v732, %v733
    %v735 = vrot.slane %v734, 2
    %v736 = vadd.f32 %v734, %v735
    %v737 = vrot.slane %v736, 1
    %v738 = vadd.f32 %v736, %v737
    %v739 = vsel %vm480, %v638, 0.0
    %v740 = vrot.slane %v739, 4
    %v741 = vadd.f32 %v739, %v740
    %v742 = vrot.slane %v741, 2
    %v743 = vadd.f32 %v741, %v742
    %v744 = vrot.slane %v743, 1
    %v745 = vadd.f32 %v743, %v744
    %v746 = vsel %vm480, %v640, 0.0
    %v747 = vrot.slane %v746, 4
    %v748 = vadd.f32 %v746, %v747
    %v749 = vrot.slane %v748, 2
    %v750 = vadd.f32 %v748, %v749
    %v751 = vrot.slane %v750, 1
    %v752 = vadd.f32 %v750, %v751
    %v753 = vrcp.pop %v647
    %v754 = vrcp.pop %v654
    %v755 = vrcp.pop %v661
    %v756 = vrcp.pop %v668
    %v757 = vrcp.pop %v675
    %v758 = vrcp.pop %v682
    %v759 = vrcp.pop %v689
    %v760 = vrcp.pop %v696
    %v761 = vrcp.pop %v703
    %v762 = vrcp.pop %v710
    %v763 = vrcp.pop %v717
    %v764 = vrcp.pop %v724
    %v765 = vrcp.pop %v731
    %v766 = vrcp.pop %v738
    %v767 = vrcp.pop %v745
    %v768 = vrcp.pop %v752
    %v769 = vmul.f32 %v610, %v753
    %v770 = vmul.f32 %v612, %v754
    %v771 = vmul.f32 %v614, %v755
    %v772 = vmul.f32 %v616, %v756
    %v773 = vmul.f32 %v618, %v757
    %v774 = vmul.f32 %v620, %v758
    %v775 = vmul.f32 %v622, %v759
    %v776 = vmul.f32 %v624, %v760
    %v777 = vmul.f32 %v626, %v761
    %v778 = vmul.f32 %v628, %v762
    %v779 = vmul.f32 %v630, %v763
    %v780 = vmul.f32 %v632, %v764
    %v781 = vmul.f32 %v634, %v765
    %v782 = vmul.f32 %v636, %v766
    %v783 = vmul.f32 %v638, %v767
    %v784 = vmul.f32 %v640, %v768
    %v785 = vpack.c.bf16 %v770, %v769
    %v786 = vpack.c.bf16 %v772, %v771
    %v787 = vpack.c.bf16 %v774, %v773
    %v788 = vpack.c.bf16 %v776, %v775
    %v789 = vpack.c.bf16 %v778, %v777
    %v790 = vpack.c.bf16 %v780, %v779
    %v791 = vpack.c.bf16 %v782, %v781
    %v792 = vpack.c.bf16 %v784, %v783
    %v793 = vld [vmem:[#allocation7] sm:$0x3]
    %v795 = vsel %vm480, %v785, 0
    %v798 = vsel %vm480, %v786, 0
    %v801 = vsel %vm480, %v787, 0
    %v804 = vsel %vm480, %v788, 0
    %v807 = vsel %vm480, %v789, 0
    %v810 = vsel %vm480, %v790, 0
    %v813 = vsel %vm480, %v791, 0
    %v816 = vsel %vm480, %v792, 0
    %vm818 = vcmask 1041408
    %v820 = vsel %vm818, %v793, 0
    %822 = vmatprep.subr.bf16.mxu0 0
    %823 = vmatpush1.bf16.msra.mxu0 %v820
    %824 = vmatprep.subr.bf16.mxu0 0
    %825 = vmatpush1.bf16.msra.mxu0 0
    %826 = vmatprep.subr.bf16.mxu0 0
    %827 = vmatpush1.bf16.msra.mxu0 0
    %828 = vmatprep.subr.bf16.mxu0 0
    %829 = vmatpush1.bf16.msra.mxu0 0
    %830 = vmatprep.subr.bf16.mxu0 0
    %831 = vmatpush1.bf16.msra.mxu0 0
    %832 = vmatprep.subr.bf16.mxu0 0
    %833 = vmatpush1.bf16.msra.mxu0 0
    %834 = vmatprep.subr.bf16.mxu0 0
    %835 = vmatpush1.bf16.msra.mxu0 0
    %836 = vmatprep.subr.bf16.mxu0 0
    %837 = vmatpush1.bf16.msra.mxu0 0
    %838 = vmatprep.subr.bf16.mxu0 0
    %839 = vmatpush1.bf16.msra.mxu0 0
    %840 = vmatprep.subr.bf16.mxu0 0
    %841 = vmatpush1.bf16.msra.mxu0 0
    %842 = vmatprep.subr.bf16.mxu0 0
    %843 = vmatpush1.bf16.msra.mxu0 0
    %844 = vmatprep.subr.bf16.mxu0 0
    %845 = vmatpush1.bf16.msra.mxu0 0
    %846 = vmatprep.subr.bf16.mxu0 0
    %847 = vmatpush1.bf16.msra.mxu0 0
    %848 = vmatprep.subr.bf16.mxu0 0
    %849 = vmatpush1.bf16.msra.mxu0 0
    %850 = vmatprep.subr.bf16.mxu0 0
    %851 = vmatpush1.bf16.msra.mxu0 0
    %852 = vmatprep.subr.bf16.mxu0 0
    %853 = vmatpush1.bf16.msra.mxu0 0
    %854 = vmatprep.mubr.bf16.mxu0 0
    %855 = vmatmul.mubr.bf16.gmra.mrb[0].mxu0 %v795
    %v856 = vpop.f32.mrb[0].mxu0
    %v857 = vadd.f32 0.0, %v856
    %v858 = vpop.f32.mrb[0].mxu0
    %v859 = vpop.f32.mrb[0].mxu0
    %v860 = vadd.f32 0.0, %v859
    %v861 = vpop.f32.mrb[0].mxu0
    %862 = vmatprep.mubr.bf16.mxu0 0
    %863 = vmatmul.mubr.bf16.gmra.mrb[0].mxu0 %v798
    %v864 = vpop.f32.mrb[0].mxu0
    %v865 = vadd.f32 0.0, %v864
    %v866 = vpop.f32.mrb[0].mxu0
    %v867 = vpop.f32.mrb[0].mxu0
    %v868 = vadd.f32 0.0, %v867
    %v869 = vpop.f32.mrb[0].mxu0
    %870 = vmatprep.mubr.bf16.mxu0 0
    %871 = vmatmul.mubr.bf16.gmra.mrb[0].mxu0 %v801
    %v872 = vpop.f32.mrb[0].mxu0
    %v873 = vadd.f32 0.0, %v872
    %v874 = vpop.f32.mrb[0].mxu0
    %v875 = vpop.f32.mrb[0].mxu0
    %v876 = vadd.f32 0.0, %v875
    %v877 = vpop.f32.mrb[0].mxu0
    %878 = vmatprep.mubr.bf16.mxu0 0
    %879 = vmatmul.mubr.bf16.gmra.mrb[0].mxu0 %v804
    %v880 = vpop.f32.mrb[0].mxu0
    %v881 = vadd.f32 0.0, %v880
    %v882 = vpop.f32.mrb[0].mxu0
    %v883 = vpop.f32.mrb[0].mxu0
    %v884 = vadd.f32 0.0, %v883
    %v885 = vpop.f32.mrb[0].mxu0
    %886 = vmatprep.mubr.bf16.mxu0 0
    %887 = vmatmul.mubr.bf16.gmra.mrb[0].mxu0 %v807
    %v888 = vpop.f32.mrb[0].mxu0
    %v889 = vadd.f32 0.0, %v888
    %v890 = vpop.f32.mrb[0].mxu0
    %v891 = vpop.f32.mrb[0].mxu0
    %v892 = vadd.f32 0.0, %v891
    %v893 = vpop.f32.mrb[0].mxu0
    %894 = vmatprep.mubr.bf16.mxu0 0
    %895 = vmatmul.mubr.bf16.gmra.mrb[0].mxu0 %v810
    %v896 = vpop.f32.mrb[0].mxu0
    %v897 = vadd.f32 0.0, %v896
    %v898 = vpop.f32.mrb[0].mxu0
    %v899 = vpop.f32.mrb[0].mxu0
    %v900 = vadd.f32 0.0, %v899
    %v901 = vpop.f32.mrb[0].mxu0
    %902 = vmatprep.mubr.bf16.mxu0 0
    %903 = vmatmul.mubr.bf16.gmra.mrb[0].mxu0 %v813
    %v904 = vpop.f32.mrb[0].mxu0
    %v905 = vadd.f32 0.0, %v904
    %v906 = vpop.f32.mrb[0].mxu0
    %v907 = vpop.f32.mrb[0].mxu0
    %v908 = vadd.f32 0.0, %v907
    %v909 = vpop.f32.mrb[0].mxu0
    %910 = vmatprep.mubr.bf16.mxu0 0
    %911 = vmatmul.mubr.bf16.gmra.mrb[0].mxu0 %v816
    %v912 = vpop.f32.mrb[0].mxu0
    %v913 = vadd.f32 0.0, %v912
    %v914 = vpop.f32.mrb[0].mxu0
    %v915 = vpop.f32.mrb[0].mxu0
    %v916 = vadd.f32 0.0, %v915
    %v917 = vpop.f32.mrb[0].mxu0
    %918 = vdwg.mxu0
    %v919 = vunpack.c.l.bf16 %v335
    %v920 = vunpack.c.h.bf16 %v335
    %v921 = vunpack.c.l.bf16 %v336
    %v922 = vunpack.c.h.bf16 %v336
    %v923 = vunpack.c.l.bf16 %v337
    %v924 = vunpack.c.h.bf16 %v337
    %v925 = vunpack.c.l.bf16 %v338
    %v926 = vunpack.c.h.bf16 %v338
    %v927 = vunpack.c.l.bf16 %v339
    %v928 = vunpack.c.h.bf16 %v339
    %v929 = vunpack.c.l.bf16 %v340
    %v930 = vunpack.c.h.bf16 %v340
    %v931 = vunpack.c.l.bf16 %v341
    %v932 = vunpack.c.h.bf16 %v341
    %v933 = vunpack.c.l.bf16 %v342
    %v934 = vunpack.c.h.bf16 %v342
    %951 = vrot.lane.b32.xlu0 %v919, 96
    %v952 = vpop.permute.xlu0 %951
    %953 = vrot.lane.b32.xlu0 %v920, 96
    %v954 = vpop.permute.xlu0 %953
    %955 = vrot.lane.b32.xlu0 %v921, 96
    %v956 = vpop.permute.xlu0 %955
    %957 = vrot.lane.b32.xlu0 %v922, 96
    %v958 = vpop.permute.xlu0 %957
    %959 = vrot.lane.b32.xlu0 %v923, 96
    %v960 = vpop.permute.xlu0 %959
    %961 = vrot.lane.b32.xlu0 %v924, 96
    %v962 = vpop.permute.xlu0 %961
    %963 = vrot.lane.b32.xlu0 %v925, 96
    %v964 = vpop.permute.xlu0 %963
    %965 = vrot.lane.b32.xlu0 %v926, 96
    %v966 = vpop.permute.xlu0 %965
    %967 = vrot.lane.b32.xlu0 %v927, 96
    %v968 = vpop.permute.xlu0 %967
    %969 = vrot.lane.b32.xlu0 %v928, 96
    %v970 = vpop.permute.xlu0 %969
    %971 = vrot.lane.b32.xlu0 %v929, 96
    %v972 = vpop.permute.xlu0 %971
    %973 = vrot.lane.b32.xlu0 %v930, 96
    %v974 = vpop.permute.xlu0 %973
    %975 = vrot.lane.b32.xlu0 %v931, 96
    %v976 = vpop.permute.xlu0 %975
    %977 = vrot.lane.b32.xlu0 %v932, 96
    %v978 = vpop.permute.xlu0 %977
    %979 = vrot.lane.b32.xlu0 %v933, 96
    %v980 = vpop.permute.xlu0 %979
    %981 = vrot.lane.b32.xlu0 %v934, 96
    %v982 = vpop.permute.xlu0 %981
    %v999 = vmul.f32 %v857, %v952
    %v1000 = vmul.f32 %v860, %v954
    %v1001 = vmul.f32 %v865, %v956
    %v1002 = vmul.f32 %v868, %v958
    %v1003 = vmul.f32 %v873, %v960
    %v1004 = vmul.f32 %v876, %v962
    %v1005 = vmul.f32 %v881, %v964
    %v1006 = vmul.f32 %v884, %v966
    %v1007 = vmul.f32 %v889, %v968
    %v1008 = vmul.f32 %v892, %v970
    %v1009 = vmul.f32 %v897, %v972
    %v1010 = vmul.f32 %v900, %v974
    %v1011 = vmul.f32 %v905, %v976
    %v1012 = vmul.f32 %v908, %v978
    %v1013 = vmul.f32 %v913, %v980
    %v1014 = vmul.f32 %v916, %v982
    %v1015 = vsel %vm213, %v999, 0.0
    %v1016 = vrot.slane %v1015, 4
    %v1017 = vadd.f32 %v1015, %v1016
    %v1018 = vrot.slane %v1017, 2
    %v1019 = vadd.f32 %v1017, %v1018
    %v1020 = vrot.slane %v1019, 1
    %v1021 = vadd.f32 %v1019, %v1020
    %v1022 = vsel %vm213, %v1000, 0.0
    %v1023 = vrot.slane %v1022, 4
    %v1024 = vadd.f32 %v1022, %v1023
    %v1025 = vrot.slane %v1024, 2
    %v1026 = vadd.f32 %v1024, %v1025
    %v1027 = vrot.slane %v1026, 1
    %v1028 = vadd.f32 %v1026, %v1027
    %v1029 = vsel %vm213, %v1001, 0.0
    %v1030 = vrot.slane %v1029, 4
    %v1031 = vadd.f32 %v1029, %v1030
    %v1032 = vrot.slane %v1031, 2
    %v1033 = vadd.f32 %v1031, %v1032
    %v1034 = vrot.slane %v1033, 1
    %v1035 = vadd.f32 %v1033, %v1034
    %v1036 = vsel %vm213, %v1002, 0.0
    %v1037 = vrot.slane %v1036, 4
    %v1038 = vadd.f32 %v1036, %v1037
    %v1039 = vrot.slane %v1038, 2
    %v1040 = vadd.f32 %v1038, %v1039
    %v1041 = vrot.slane %v1040, 1
    %v1042 = vadd.f32 %v1040, %v1041
    %v1043 = vsel %vm213, %v1003, 0.0
    %v1044 = vrot.slane %v1043, 4
    %v1045 = vadd.f32 %v1043, %v1044
    %v1046 = vrot.slane %v1045, 2
    %v1047 = vadd.f32 %v1045, %v1046
    %v1048 = vrot.slane %v1047, 1
    %v1049 = vadd.f32 %v1047, %v1048
    %v1050 = vsel %vm213, %v1004, 0.0
    %v1051 = vrot.slane %v1050, 4
    %v1052 = vadd.f32 %v1050, %v1051
    %v1053 = vrot.slane %v1052, 2
    %v1054 = vadd.f32 %v1052, %v1053
    %v1055 = vrot.slane %v1054, 1
    %v1056 = vadd.f32 %v1054, %v1055
    %v1057 = vsel %vm213, %v1005, 0.0
    %v1058 = vrot.slane %v1057, 4
    %v1059 = vadd.f32 %v1057, %v1058
    %v1060 = vrot.slane %v1059, 2
    %v1061 = vadd.f32 %v1059, %v1060
    %v1062 = vrot.slane %v1061, 1
    %v1063 = vadd.f32 %v1061, %v1062
    %v1064 = vsel %vm213, %v1006, 0.0
    %v1065 = vrot.slane %v1064, 4
    %v1066 = vadd.f32 %v1064, %v1065
    %v1067 = vrot.slane %v1066, 2
    %v1068 = vadd.f32 %v1066, %v1067
    %v1069 = vrot.slane %v1068, 1
    %v1070 = vadd.f32 %v1068, %v1069
    %v1071 = vsel %vm213, %v1007, 0.0
    %v1072 = vrot.slane %v1071, 4
    %v1073 = vadd.f32 %v1071, %v1072
    %v1074 = vrot.slane %v1073, 2
    %v1075 = vadd.f32 %v1073, %v1074
    %v1076 = vrot.slane %v1075, 1
    %v1077 = vadd.f32 %v1075, %v1076
    %v1078 = vsel %vm213, %v1008, 0.0
    %v1079 = vrot.slane %v1078, 4
    %v1080 = vadd.f32 %v1078, %v1079
    %v1081 = vrot.slane %v1080, 2
    %v1082 = vadd.f32 %v1080, %v1081
    %v1083 = vrot.slane %v1082, 1
    %v1084 = vadd.f32 %v1082, %v1083
    %v1085 = vsel %vm213, %v1009, 0.0
    %v1086 = vrot.slane %v1085, 4
    %v1087 = vadd.f32 %v1085, %v1086
    %v1088 = vrot.slane %v1087, 2
    %v1089 = vadd.f32 %v1087, %v1088
    %v1090 = vrot.slane %v1089, 1
    %v1091 = vadd.f32 %v1089, %v1090
    %v1092 = vsel %vm213, %v1010, 0.0
    %v1093 = vrot.slane %v1092, 4
    %v1094 = vadd.f32 %v1092, %v1093
    %v1095 = vrot.slane %v1094, 2
    %v1096 = vadd.f32 %v1094, %v1095
    %v1097 = vrot.slane %v1096, 1
    %v1098 = vadd.f32 %v1096, %v1097
    %v1099 = vsel %vm213, %v1011, 0.0
    %v1100 = vrot.slane %v1099, 4
    %v1101 = vadd.f32 %v1099, %v1100
    %v1102 = vrot.slane %v1101, 2
    %v1103 = vadd.f32 %v1101, %v1102
    %v1104 = vrot.slane %v1103, 1
    %v1105 = vadd.f32 %v1103, %v1104
    %v1106 = vsel %vm213, %v1012, 0.0
    %v1107 = vrot.slane %v1106, 4
    %v1108 = vadd.f32 %v1106, %v1107
    %v1109 = vrot.slane %v1108, 2
    %v1110 = vadd.f32 %v1108, %v1109
    %v1111 = vrot.slane %v1110, 1
    %v1112 = vadd.f32 %v1110, %v1111
    %v1113 = vsel %vm213, %v1013, 0.0
    %v1114 = vrot.slane %v1113, 4
    %v1115 = vadd.f32 %v1113, %v1114
    %v1116 = vrot.slane %v1115, 2
    %v1117 = vadd.f32 %v1115, %v1116
    %v1118 = vrot.slane %v1117, 1
    %v1119 = vadd.f32 %v1117, %v1118
    %v1120 = vsel %vm213, %v1014, 0.0
    %v1121 = vrot.slane %v1120, 4
    %v1122 = vadd.f32 %v1120, %v1121
    %v1123 = vrot.slane %v1122, 2
    %v1124 = vadd.f32 %v1122, %v1123
    %v1125 = vrot.slane %v1124, 1
    %v1126 = vadd.f32 %v1124, %v1125
    %v1127 = vpack.c.bf16 %v1021, %v1021
    %v1128 = vpack.c.bf16 %v1028, %v1028
    %v1129 = vpack.c.bf16 %v1035, %v1035
    %v1130 = vpack.c.bf16 %v1042, %v1042
    %v1131 = vpack.c.bf16 %v1049, %v1049
    %v1132 = vpack.c.bf16 %v1056, %v1056
    %v1133 = vpack.c.bf16 %v1063, %v1063
    %v1134 = vpack.c.bf16 %v1070, %v1070
    %v1135 = vpack.c.bf16 %v1077, %v1077
    %v1136 = vpack.c.bf16 %v1084, %v1084
    %v1137 = vpack.c.bf16 %v1091, %v1091
    %v1138 = vpack.c.bf16 %v1098, %v1098
    %v1139 = vpack.c.bf16 %v1105, %v1105
    %v1140 = vpack.c.bf16 %v1112, %v1112
    %v1141 = vpack.c.bf16 %v1119, %v1119
    %v1142 = vpack.c.bf16 %v1126, %v1126
    %v1143 = vld [vmem:[%s5] sm:$0xf]
    %v1144 = vld [vmem:[%s5 + $0x4] sm:$0xf]
    %v1145 = vld [vmem:[%s5 + $0x8] sm:$0xf]
    %v1146 = vld [vmem:[%s5 + $0xc] sm:$0xf]
    %v1147 = vld [vmem:[#allocation8] sm:$0x1]
    %v1149 = vlaneseq
    %v1150 = vshrl.u32 %v1149, 7
    %v1151 = vsub.s32 0, %v1150
    %v1152 = vrot.slane %v1147, %v1151
    %v1170 = vunpack.c.l.b16 %v1127
    %v1171 = vunpack.c.l.b16 %v1128
    %v1172 = vunpack.c.l.b16 %v1129
    %v1173 = vunpack.c.l.b16 %v1130
    %v1174 = vunpack.c.l.b16 %v1131
    %v1175 = vunpack.c.l.b16 %v1132
    %v1176 = vunpack.c.l.b16 %v1133
    %v1177 = vunpack.c.l.b16 %v1134
    %v1178 = vunpack.c.l.b16 %v1135
    %v1179 = vunpack.c.l.b16 %v1136
    %v1180 = vunpack.c.l.b16 %v1137
    %v1181 = vunpack.c.l.b16 %v1138
    %v1182 = vunpack.c.l.b16 %v1139
    %v1183 = vunpack.c.l.b16 %v1140
    %v1184 = vunpack.c.l.b16 %v1141
    %v1185 = vunpack.c.l.b16 %v1142
    %vm1186 = vcmask 1041409
    %v1187 = vsel %vm1186, %v1171, %v1170
    %vm1188 = vcmask 1042434
    %v1189 = vsel %vm1188, %v1172, %v1187
    %vm1190 = vcmask 1043459
    %v1191 = vsel %vm1190, %v1173, %v1189
    %vm1192 = vcmask 1044484
    %v1193 = vsel %vm1192, %v1174, %v1191
    %vm1194 = vcmask 1045509
    %v1195 = vsel %vm1194, %v1175, %v1193
    %vm1196 = vcmask 1046534
    %v1197 = vsel %vm1196, %v1176, %v1195
    %vm1198 = vcmask 1047559
    %v1199 = vsel %vm1198, %v1177, %v1197
    %v1200 = vsel %vm1186, %v1179, %v1178
    %v1201 = vsel %vm1188, %v1180, %v1200
    %v1202 = vsel %vm1190, %v1181, %v1201
    %v1203 = vsel %vm1192, %v1182, %v1202
    %v1204 = vsel %vm1194, %v1183, %v1203
    %v1205 = vsel %vm1196, %v1184, %v1204
    %v1206 = vsel %vm1198, %v1185, %v1205
    %v1207 = vpack.c.b16 %v1206, %v1199
    %v1212 = vunpack.c.l.b16 %v1143
    %v1213 = vunpack.c.l.b16 %v1144
    %v1214 = vunpack.c.l.b16 %v1145
    %v1215 = vunpack.c.l.b16 %v1146
    %v1216 = vpack.c.b16 %v1213, %v1212
    %v1217 = vpack.c.b16 %v1215, %v1214
    %v1221 = vsel %vm213, %v1207, 0
    %1223 = vmatprep.subr.bf16.mxu0 0
    %1224 = vmatpush1.bf16.msra.mxu0 %v1216
    %1225 = vmatprep.subr.bf16.mxu0 0
    %1226 = vmatpush1.bf16.msra.mxu0 %v1217
    %1227 = vmatprep.subr.bf16.mxu0 0
    %1228 = vmatpush1.bf16.msra.mxu0 0
    %1229 = vmatprep.subr.bf16.mxu0 0
    %1230 = vmatpush1.bf16.msra.mxu0 0
    %1231 = vmatprep.subr.bf16.mxu0 0
    %1232 = vmatpush1.bf16.msra.mxu0 0
    %1233 = vmatprep.subr.bf16.mxu0 0
    %1234 = vmatpush1.bf16.msra.mxu0 0
    %1235 = vmatprep.subr.bf16.mxu0 0
    %1236 = vmatpush1.bf16.msra.mxu0 0
    %1237 = vmatprep.subr.bf16.mxu0 0
    %1238 = vmatpush1.bf16.msra.mxu0 0
    %1239 = vmatprep.subr.bf16.mxu0 0
    %1240 = vmatpush1.bf16.msra.mxu0 0
    %1241 = vmatprep.subr.bf16.mxu0 0
    %1242 = vmatpush1.bf16.msra.mxu0 0
    %1243 = vmatprep.subr.bf16.mxu0 0
    %1244 = vmatpush1.bf16.msra.mxu0 0
    %1245 = vmatprep.subr.bf16.mxu0 0
    %1246 = vmatpush1.bf16.msra.mxu0 0
    %1247 = vmatprep.subr.bf16.mxu0 0
    %1248 = vmatpush1.bf16.msra.mxu0 0
    %1249 = vmatprep.subr.bf16.mxu0 0
    %1250 = vmatpush1.bf16.msra.mxu0 0
    %1251 = vmatprep.subr.bf16.mxu0 0
    %1252 = vmatpush1.bf16.msra.mxu0 0
    %1253 = vmatprep.subr.bf16.mxu0 0
    %1254 = vmatpush1.bf16.msra.mxu0 0
    %1255 = vmatprep.mubr.bf16.mxu0 0
    %1256 = vmatmul.mubr.bf16.gmra.mrb[0].mxu0 %v1221
    %v1257 = vpop.f32.mrb[0].mxu0
    %v1258 = vadd.f32 %v1152, %v1257
    %v1259 = vpop.f32.mrb[0].mxu0
    %v1260 = vpop.f32.mrb[0].mxu0
    %v1261 = vadd.f32 %v1152, %v1260
    %v1262 = vpop.f32.mrb[0].mxu0
    %1263 = vdwg.mxu0
    %v1264 = vsel %vm213, %v1258, 0.0
    %1265 = vadd.xlane.f32.xlu0 %v1264
    %v1266 = vpop.xlane.xlu0 %1265
    %v1267 = vsel %vm213, %v1261, 0.0
    %1268 = vadd.xlane.f32.xlu0 %v1267
    %v1269 = vpop.xlane.xlu0 %1268
    %v1270 = vrcp.pop 32.0
    %v1271 = vmul.f32 %v1266, %v1270
    %v1272 = vmul.f32 %v1269, %v1270
    %v1273 = vsub.f32 %v1258, %v1271
    %v1274 = vsub.f32 %v1261, %v1272
    %v1275 = vmul.f32 %v1273, %v1273
    %v1276 = vmul.f32 %v1274, %v1274
    %v1277 = vsel %vm213, %v1275, 0.0
    %1278 = vadd.xlane.f32.xlu0 %v1277
    %v1279 = vpop.xlane.xlu0 %1278
    %v1280 = vsel %vm213, %v1276, 0.0
    %1281 = vadd.xlane.f32.xlu0 %v1280
    %v1282 = vpop.xlane.xlu0 %1281
    %v1283 = vmul.f32 %v1279, %v1270
    %v1284 = vmul.f32 %v1282, %v1270
    %v1285 = vadd.f32 %v1283, 1e-05
    %v1286 = vadd.f32 %v1284, 1e-05
    %v1287 = vrsqrt.pop %v1285
    %v1288 = vrsqrt.pop %v1286
    %v1289 = vmul.f32 %v1273, %v1287
    %v1290 = vmul.f32 %v1274, %v1288
    %v1291 = vld [vmem:[#allocation10] sm:$0x1]
    %v1293 = vlaneseq
    %v1294 = vshrl.u32 %v1293, 7
    %v1295 = vsub.s32 0, %v1294
    %v1296 = vrot.slane %v1291, %v1295
    %v1298 = vmul.f32 %v1289, %v1296
    %v1299 = vmul.f32 %v1290, %v1296
    %v1300 = vld [vmem:[#allocation11] sm:$0x1]
    %v1302 = vlaneseq
    %v1303 = vshrl.u32 %v1302, 7
    %v1304 = vsub.s32 0, %v1303
    %v1305 = vrot.slane %v1300, %v1304
    %v1307 = vadd.f32 %v1298, %v1305
    %v1308 = vadd.f32 %v1299, %v1305
    %v1309 = vpack.c.bf16 %v1308, %v1307
    %v1310 = vld [vmem:[%s9] sm:$0xf]
    %v1311 = vld [vmem:[%s9 + $0x4] sm:$0xf]
    %v1312 = vld [vmem:[%s9 + $0x8] sm:$0xf]
    %v1313 = vld [vmem:[%s9 + $0xc] sm:$0xf]
    %v1314 = vld [vmem:[%s10] sm:$0x1]
    %v1316 = vlaneseq
    %v1317 = vshrl.u32 %v1316, 7
    %v1318 = vsub.s32 0, %v1317
    %v1319 = vrot.slane %v1314, %v1318
    %v1325 = vunpack.c.l.b16 %v1310
    %v1326 = vunpack.c.l.b16 %v1311
    %v1327 = vunpack.c.l.b16 %v1312
    %v1328 = vunpack.c.l.b16 %v1313
    %v1329 = vpack.c.b16 %v1326, %v1325
    %v1330 = vpack.c.b16 %v1328, %v1327
    %v1334 = vsel %vm213, %v1309, 0
    %1336 = vmatprep.subr.bf16.mxu0 0
    %1337 = vmatpush1.bf16.msra.mxu0 %v1329
    %1338 = vmatprep.subr.bf16.mxu0 0
    %1339 = vmatpush1.bf16.msra.mxu0 %v1330
    %1340 = vmatprep.subr.bf16.mxu0 0
    %1341 = vmatpush1.bf16.msra.mxu0 0
    %1342 = vmatprep.subr.bf16.mxu0 0
    %1343 = vmatpush1.bf16.msra.mxu0 0
    %1344 = vmatprep.subr.bf16.mxu0 0
    %1345 = vmatpush1.bf16.msra.mxu0 0
    %1346 = vmatprep.subr.bf16.mxu0 0
    %1347 = vmatpush1.bf16.msra.mxu0 0
    %1348 = vmatprep.subr.bf16.mxu0 0
    %1349 = vmatpush1.bf16.msra.mxu0 0
    %1350 = vmatprep.subr.bf16.mxu0 0
    %1351 = vmatpush1.bf16.msra.mxu0 0
    %1352 = vmatprep.subr.bf16.mxu0 0
    %1353 = vmatpush1.bf16.msra.mxu0 0
    %1354 = vmatprep.subr.bf16.mxu0 0
    %1355 = vmatpush1.bf16.msra.mxu0 0
    %1356 = vmatprep.subr.bf16.mxu0 0
    %1357 = vmatpush1.bf16.msra.mxu0 0
    %1358 = vmatprep.subr.bf16.mxu0 0
    %1359 = vmatpush1.bf16.msra.mxu0 0
    %1360 = vmatprep.subr.bf16.mxu0 0
    %1361 = vmatpush1.bf16.msra.mxu0 0
    %1362 = vmatprep.subr.bf16.mxu0 0
    %1363 = vmatpush1.bf16.msra.mxu0 0
    %1364 = vmatprep.subr.bf16.mxu0 0
    %1365 = vmatpush1.bf16.msra.mxu0 0
    %1366 = vmatprep.subr.bf16.mxu0 0
    %1367 = vmatpush1.bf16.msra.mxu0 0
    %1368 = vmatprep.mubr.bf16.mxu0 0
    %1369 = vmatmul.mubr.bf16.gmra.mrb[0].mxu0 %v1334
    %v1370 = vpop.f32.mrb[0].mxu0
    %v1371 = vadd.f32 %v1319, %v1370
    %v1372 = vpop.f32.mrb[0].mxu0
    %v1373 = vpop.f32.mrb[0].mxu0
    %v1374 = vadd.f32 %v1319, %v1373
    %v1375 = vpop.f32.mrb[0].mxu0
    %1376 = vdwg.mxu0
    %v1377 = vmul.f32 %v1371, 0.5
    %v1378 = vmul.f32 %v1374, 0.5
    %v1379 = vmul.f32 %v1371, 0.70710677
    %v1380 = vmul.f32 %v1374, 0.70710677
    %v1381 = verf.f32.pop %v1379
    %v1382 = verf.f32.pop %v1380
    %v1383 = vadd.f32 %v1381, 1.0
    %v1384 = vadd.f32 %v1382, 1.0
    %v1385 = vmul.f32 %v1377, %v1383
    %v1386 = vmul.f32 %v1378, %v1384
    %v1387 = vpack.c.bf16 %v1261, %v1258
    %v1388 = vld [vmem:[%s13] sm:$0xf]
    %v1389 = vld [vmem:[%s13 + $0x4] sm:$0xf]
    %v1390 = vld [vmem:[%s13 + $0x8] sm:$0xf]
    %v1391 = vld [vmem:[%s13 + $0xc] sm:$0xf]
    %v1392 = vpack.c.bf16 %v1386, %v1385
    %v1393 = vld [vmem:[#allocation13] sm:$0xf]
    %v1394 = vld [vmem:[#allocation13 + $0x4] sm:$0xf]
    %v1395 = vld [vmem:[#allocation13 + $0x8] sm:$0xf]
    %v1396 = vld [vmem:[#allocation13 + $0xc] sm:$0xf]
    %v1397 = vld [vmem:[#allocation13 + $0x10] sm:$0xf]
    %v1398 = vld [vmem:[#allocation13 + $0x14] sm:$0xf]
    %v1399 = vld [vmem:[#allocation13 + $0x18] sm:$0xf]
    %v1400 = vld [vmem:[#allocation13 + $0x1c] sm:$0xf]
    %v1401 = vld [vmem:[#allocation13 + $0x20] sm:$0xf]
    %v1402 = vld [vmem:[#allocation13 + $0x24] sm:$0xf]
    %v1403 = vld [vmem:[#allocation13 + $0x28] sm:$0xf]
    %v1404 = vld [vmem:[#allocation13 + $0x2c] sm:$0xf]
    %v1405 = vld [vmem:[#allocation13 + $0x30] sm:$0xf]
    %v1406 = vld [vmem:[#allocation13 + $0x34] sm:$0xf]
    %v1407 = vld [vmem:[#allocation13 + $0x38] sm:$0xf]
    %v1408 = vld [vmem:[#allocation13 + $0x3c] sm:$0xf]
    %v1425 = vunpack.c.l.b16 %v1393
    %v1426 = vunpack.c.l.b16 %v1394
    %v1427 = vunpack.c.l.b16 %v1395
    %v1428 = vunpack.c.l.b16 %v1396
    %v1429 = vunpack.c.l.b16 %v1397
    %v1430 = vunpack.c.l.b16 %v1398
    %v1431 = vunpack.c.l.b16 %v1399
    %v1432 = vunpack.c.l.b16 %v1400
    %v1433 = vunpack.c.l.b16 %v1401
    %v1434 = vunpack.c.l.b16 %v1402
    %v1435 = vunpack.c.l.b16 %v1403
    %v1436 = vunpack.c.l.b16 %v1404
    %v1437 = vunpack.c.l.b16 %v1405
    %v1438 = vunpack.c.l.b16 %v1406
    %v1439 = vunpack.c.l.b16 %v1407
    %v1440 = vunpack.c.l.b16 %v1408
    %v1441 = vpack.c.b16 %v1426, %v1425
    %v1442 = vpack.c.b16 %v1428, %v1427
    %v1443 = vpack.c.b16 %v1430, %v1429
    %v1444 = vpack.c.b16 %v1432, %v1431
    %v1445 = vpack.c.b16 %v1434, %v1433
    %v1446 = vpack.c.b16 %v1436, %v1435
    %v1447 = vpack.c.b16 %v1438, %v1437
    %v1448 = vpack.c.b16 %v1440, %v1439
    %1457 = vmatprep.subr.bf16.mxu0 0
    %1458 = vmatpush1.bf16.msra.mxu0 %v1441
    %1459 = vmatprep.subr.bf16.mxu0 0
    %1460 = vmatpush1.bf16.msra.mxu0 %v1442
    %1461 = vmatprep.subr.bf16.mxu0 0
    %1462 = vmatpush1.bf16.msra.mxu0 %v1443
    %1463 = vmatprep.subr.bf16.mxu0 0
    %1464 = vmatpush1.bf16.msra.mxu0 %v1444
    %1465 = vmatprep.subr.bf16.mxu0 0
    %1466 = vmatpush1.bf16.msra.mxu0 %v1445
    %1467 = vmatprep.subr.bf16.mxu0 0
    %1468 = vmatpush1.bf16.msra.mxu0 %v1446
    %1469 = vmatprep.subr.bf16.mxu0 0
    %1470 = vmatpush1.bf16.msra.mxu0 %v1447
    %1471 = vmatprep.subr.bf16.mxu0 0
    %1472 = vmatpush1.bf16.msra.mxu0 %v1448
    %1473 = vmatprep.subr.bf16.mxu0 0
    %1474 = vmatpush1.bf16.msra.mxu0 0
    %1475 = vmatprep.subr.bf16.mxu0 0
    %1476 = vmatpush1.bf16.msra.mxu0 0
    %1477 = vmatprep.subr.bf16.mxu0 0
    %1478 = vmatpush1.bf16.msra.mxu0 0
    %1479 = vmatprep.subr.bf16.mxu0 0
    %1480 = vmatpush1.bf16.msra.mxu0 0
    %1481 = vmatprep.subr.bf16.mxu0 0
    %1482 = vmatpush1.bf16.msra.mxu0 0
    %1483 = vmatprep.subr.bf16.mxu0 0
    %1484 = vmatpush1.bf16.msra.mxu0 0
    %1485 = vmatprep.subr.bf16.mxu0 0
    %1486 = vmatpush1.bf16.msra.mxu0 0
    %1487 = vmatprep.subr.bf16.mxu0 0
    %1488 = vmatpush1.bf16.msra.mxu0 0
    %1489 = vmatprep.mubr.bf16.mxu0 0
    %1490 = vmatmul.mubr.bf16.gmra.mrb[0].mxu0 %v1392
    %v1491 = vpop.f32.mrb[0].mxu0
    %v1492 = vadd.f32 0.0, %v1491
    %v1493 = vpop.f32.mrb[0].mxu0
    %v1494 = vpop.f32.mrb[0].mxu0
    %v1495 = vadd.f32 0.0, %v1494
    %v1496 = vpop.f32.mrb[0].mxu0
    %1497 = vdwg.mxu0
    %v1502 = vunpack.c.l.b16 %v1388
    %v1503 = vunpack.c.l.b16 %v1389
    %v1504 = vunpack.c.l.b16 %v1390
    %v1505 = vunpack.c.l.b16 %v1391
    %v1506 = vpack.c.b16 %v1503, %v1502
    %v1507 = vpack.c.b16 %v1505, %v1504
    %v1511 = vsel %vm213, %v1387, 0
    %1513 = vmatprep.subr.bf16.mxu0 0
    %1514 = vmatpush1.bf16.msra.mxu0 %v1506
    %1515 = vmatprep.subr.bf16.mxu0 0
    %1516 = vmatpush1.bf16.msra.mxu0 %v1507
    %1517 = vmatprep.subr.bf16.mxu0 0
    %1518 = vmatpush1.bf16.msra.mxu0 0
    %1519 = vmatprep.subr.bf16.mxu0 0
    %1520 = vmatpush1.bf16.msra.mxu0 0
    %1521 = vmatprep.subr.bf16.mxu0 0
    %1522 = vmatpush1.bf16.msra.mxu0 0
    %1523 = vmatprep.subr.bf16.mxu0 0
    %1524 = vmatpush1.bf16.msra.mxu0 0
    %1525 = vmatprep.subr.bf16.mxu0 0
    %1526 = vmatpush1.bf16.msra.mxu0 0
    %1527 = vmatprep.subr.bf16.mxu0 0
    %1528 = vmatpush1.bf16.msra.mxu0 0
    %1529 = vmatprep.subr.bf16.mxu0 0
    %1530 = vmatpush1.bf16.msra.mxu0 0
    %1531 = vmatprep.subr.bf16.mxu0 0
    %1532 = vmatpush1.bf16.msra.mxu0 0
    %1533 = vmatprep.subr.bf16.mxu0 0
    %1534 = vmatpush1.bf16.msra.mxu0 0
    %1535 = vmatprep.subr.bf16.mxu0 0
    %1536 = vmatpush1.bf16.msra.mxu0 0
    %1537 = vmatprep.subr.bf16.mxu0 0
    %1538 = vmatpush1.bf16.msra.mxu0 0
    %1539 = vmatprep.subr.bf16.mxu0 0
    %1540 = vmatpush1.bf16.msra.mxu0 0
    %1541 = vmatprep.subr.bf16.mxu0 0
    %1542 = vmatpush1.bf16.msra.mxu0 0
    %1543 = vmatprep.subr.bf16.mxu0 0
    %1544 = vmatpush1.bf16.msra.mxu0 0
    %1545 = vmatprep.mubr.bf16.mxu0 0
    %1546 = vmatmul.mubr.bf16.gmra.mrb[0].mxu0 %v1511
    %v1547 = vpop.f32.mrb[0].mxu0
    %v1548 = vadd.f32 %v1492, %v1547
    %v1549 = vpop.f32.mrb[0].mxu0
    %v1550 = vpop.f32.mrb[0].mxu0
    %v1551 = vadd.f32 %v1495, %v1550
    %v1552 = vpop.f32.mrb[0].mxu0
    %1553 = vdwg.mxu0
    %v1554 = vld [vmem:[%s12] sm:$0x1]
    %v1556 = vlaneseq
    %v1557 = vshrl.u32 %v1556, 7
    %v1558 = vsub.s32 0, %v1557
    %v1559 = vrot.slane %v1554, %v1558
    %v1561 = vadd.f32 %v1548, %v1559
    %v1562 = vadd.f32 %v1551, %v1559
    %1563 = vst [vmem:[#allocation14] sm:$0xff] %v1561
    %1564 = vst [vmem:[#allocation14 + $0x8] sm:$0xff] %v1562
    // Predicated region
    $region86: #{tpu_custom_call.1} parent=1 // pred_check
      _
    $region87: #{tpu_custom_call.1} parent=1 // pred_check_branch
      %1566 = sbr.rel (0) target = $region89
    $region88: #{tpu_custom_call.1} parent=1 // pred_region
      %s1568 = ssub.s32 256, 256
      %1569 = vsyncadd [#allocation4], %s1568
      %s1570 = sshll.u32 [#allocation14], 4
      %s1571 = int_to_ptr.vmem [resolvable:$true] %s1570
      %1576 = dma.vmem_to_hbm [thread:$0]  %s1571, 256, %s14, [#allocation4], 128, 128, 8
    $region89: #{tpu_custom_call.1} parent=1 // pred_fallthru
      _
    // Predicated region
    $region90: #{tpu_custom_call.1} parent=1 // pred_check
      _
    $region91: #{tpu_custom_call.1} parent=1 // pred_check_branch
      %1578 = sbr.rel (0) target = $region93
    $region92: #{tpu_custom_call.1} parent=1 // pred_region
      %1579 = dma.done [#allocation4], 256
    $region93: #{tpu_custom_call.1} parent=1 // pred_fallthru
      _
    %1580 = vsyncpa [#allocation3], 1
    %1581 = vsyncpa [#allocation6], 1
    %1582 = vsyncpa [#allocation9], 1
    %1583 = vsyncpa [#allocation12], 1
    %1584 = vsyncpa [#allocation4], 1

</llo_original>
